<compile_context>
chip_gen: v7x
topology: tpu7x:2x2x1
jax: 0.10.0
libtpu: 0.0.40
codegen_flags: <defaults>
</compile_context>

<pallas_src>
import numpy as np
import jax
import jax.numpy as jnp
from jax.experimental import pallas as pl
from jax.experimental.pallas import tpu as pltpu


# ----------------------------------------------------------------------------
# Pallas kernel: one batch tile of the fused decoder
#   relu(z @ Wfc + bfc) -> relu(. @ M1) -> relu(. @ M2) -> . @ M3
# ConvT biases are folded into M1/M2/M3 through the constant-1 column that bfc
# plants in a padded column of the fc1 output.
# ----------------------------------------------------------------------------
def _decoder_kernel(z_ref, wfc_ref, bfc_ref, m1_ref, m2_ref, m3_ref, out_ref):
    f32 = jnp.float32
    bf16 = jnp.bfloat16

    z = z_ref[...].astype(bf16)
    # fc1 + bias (also plants the constant-1 column) + ReLU (bf16 epilogue)
    h = jnp.dot(z, wfc_ref[...], preferred_element_type=f32) + bfc_ref[...]
    h = jnp.maximum(h.astype(bf16), 0.0)
    # ConvT(64->64, k4, s2, p1)  [bias folded into M1]  + ReLU
    h = jnp.dot(h, m1_ref[...], preferred_element_type=f32)
    h = jnp.maximum(h.astype(bf16), 0.0)
    # ConvT(64->32, k3, s2, p1)  [bias folded into M2]  + ReLU
    h = jnp.dot(h, m2_ref[...], preferred_element_type=f32)
    h = jnp.maximum(h.astype(bf16), 0.0)
    # ConvT(32->out, k3, s1, p1) [bias folded into M3], f32 lane-dense output
    out_ref[...] = jnp.dot(h, m3_ref[...], preferred_element_type=f32)


# ----------------------------------------------------------------------------
# ConvTranspose2d weight (Ci, Co, Kh, Kw)  ->  dense scatter matrix
# mapping flattened (Ci,Hin,Win) -> flattened (Co,Hout,Wout).
# ----------------------------------------------------------------------------
def _convt_to_matrix(w, stride, pad, hin, win):
    ci, co, kh, kw = w.shape
    hout = (hin - 1) * stride - 2 * pad + kh
    wout = (win - 1) * stride - 2 * pad + kw
    m = np.zeros((ci * hin * win, co * hout * wout), np.float32)
    co_offsets = np.arange(co) * (hout * wout)
    for c_in in range(ci):
        for ih in range(hin):
            for iw in range(win):
                row = (c_in * hin + ih) * win + iw
                for dkh in range(kh):
                    oh = ih * stride - pad + dkh
                    if oh < 0 or oh >= hout:
                        continue
                    for dkw in range(kw):
                        ow = iw * stride - pad + dkw
                        if ow < 0 or ow >= wout:
                            continue
                        m[row, co_offsets + oh * wout + ow] = w[c_in, :, dkh, dkw]
    return m, hout, wout


def _pad_to(x, rows, cols):
    out = np.zeros((rows, cols), x.dtype)
    out[: x.shape[0], : x.shape[1]] = x
    return out


def _round_up(n, m):
    return ((n + m - 1) // m) * m


def _num_tensorcores():
    """Grid steps = one per TensorCore: 1 on v2-v6e (single TC), 2 on v7x."""
    try:
        kind = jax.devices()[0].device_kind.lower()
    except Exception:
        return 1
    return 2 if ("v7" in kind or "7x" in kind) else 1


# ----------------------------------------------------------------------------
# One-time host-side constant construction (hoisted out of the forward path).
# ----------------------------------------------------------------------------
def build_decoder_constants(params, w_spatial, h_spatial, output_dim):
    fc1_w, fc1_b = (np.asarray(a, np.float32) for a in params["fc1"])
    ct1_w, ct1_b = (np.asarray(a, np.float32) for a in params["ct1"])
    ct2_w, ct2_b = (np.asarray(a, np.float32) for a in params["ct2"])
    ct3_w, ct3_b = (np.asarray(a, np.float32) for a in params["ct3"])

    # torch: out.view(-1, 64, self.w, self.h)  =>  H = w, W = h
    hin0, win0 = w_spatial, h_spatial
    m1, h1, w1 = _convt_to_matrix(ct1_w, stride=2, pad=1, hin=hin0, win=win0)
    m2, h2, w2 = _convt_to_matrix(ct2_w, stride=2, pad=1, hin=h1, win=w1)
    m3, h3, w3 = _convt_to_matrix(ct3_w, stride=1, pad=1, hin=h2, win=w2)

    d_fc = fc1_w.shape[1]                 # 64  (real fc1 width)
    d1 = m1.shape[1]                      # 256 (64 * 2*2)
    d2 = m2.shape[1]                      # 288 (32 * 3*3)
    d3 = m3.shape[1]                      # 27  (out_dim * 3*3)

    # Lane-dense padded widths (multiples of 128) with one spare column per
    # intermediate layer to carry the constant-1 used for the bias folding.
    p_fc = _round_up(d_fc + 1, 128)       # 128
    p1 = _round_up(d1 + 1, 128)           # 384
    p2 = _round_up(d2 + 1, 128)           # 384
    p3 = _round_up(d3, 128)               # 128
    one_fc, one_1, one_2 = d_fc, d1, d2   # column indices of the constant-1 path

    # fc1: padded weight; bias carries the real fc1 bias plus a 1.0 in the
    # first spare column (it survives ReLU and every downstream matrix uses it
    # to inject that layer's bias -- no separate bias operands in the kernel).
    wfc = _pad_to(fc1_w, fc1_w.shape[0], p_fc)
    bfc = np.zeros((1, p_fc), np.float32)
    bfc[0, :d_fc] = fc1_b
    bfc[0, one_fc] = 1.0

    m1p = _pad_to(m1, p_fc, p1)
    m1p[one_fc, :d1] = np.repeat(ct1_b, h1 * w1)   # bias of ConvT1
    m1p[one_fc, one_1] = 1.0                       # propagate the constant 1

    m2p = _pad_to(m2, p1, p2)
    m2p[one_1, :d2] = np.repeat(ct2_b, h2 * w2)    # bias of ConvT2
    m2p[one_1, one_2] = 1.0

    m3p = _pad_to(m3, p2, p3)
    m3p[one_2, :d3] = np.repeat(ct3_b, h3 * w3)    # bias of ConvT3

    return {
        # weights as bf16 device arrays (single-pass MXU), fc1 bias f32
        "wfc": jnp.asarray(wfc, jnp.bfloat16), "bfc": jnp.asarray(bfc, jnp.float32),
        "m1": jnp.asarray(m1p, jnp.bfloat16),
        "m2": jnp.asarray(m2p, jnp.bfloat16),
        "m3": jnp.asarray(m3p, jnp.bfloat16),
        "out_dim": output_dim, "h3": h3, "w3": w3,
        "latent_dim": fc1_w.shape[0],
        "d3": d3, "p_fc": p_fc, "p1": p1, "p2": p2, "p3": p3,
    }


# ----------------------------------------------------------------------------
# Build a jitted forward for a fixed batch size: pad / pallas_call / slice /
# reshape all fuse into one executable (no extra XLA launches around the kernel).
# ----------------------------------------------------------------------------
def make_decoder_forward(consts, batch_size, *, batch_tile=None):
    B = int(batch_size)
    latent = consts["latent_dim"]
    p_fc, p1, p2, p3 = consts["p_fc"], consts["p1"], consts["p2"], consts["p3"]
    d3 = consts["d3"]

    if batch_tile is None:
        # One grid step per TensorCore (1 on v5e/v6e, 2 on v7x); extra steps
        # are pure fixed overhead for this latency-bound kernel.
        batch_tile = pl.cdiv(B, _num_tensorcores())
    TB = max(8, _round_up(int(batch_tile), 8))
    Bp = _round_up(B, TB)
    grid = (Bp // TB,)

    weight_args = (consts["wfc"], consts["bfc"],
                   consts["m1"], consts["m2"], consts["m3"])

    def resident(arr):
        # Constant index_map -> block stays VMEM-resident across grid steps;
        # Buffered(1) avoids a useless second copy / buffer-swap bookkeeping.
        return pl.BlockSpec(arr.shape, lambda i: (0, 0),
                            pipeline_mode=pl.Buffered(1))

    grid_spec = pltpu.PrefetchScalarGridSpec(
        num_scalar_prefetch=0,
        grid=grid,
        in_specs=[pl.BlockSpec((TB, latent), lambda i: (i, 0))]
                 + [resident(a) for a in weight_args],
        out_specs=pl.BlockSpec((TB, p3), lambda i: (i, 0)),
    )

    flops = 2 * Bp * (latent * p_fc + p_fc * p1 + p1 * p2 + p2 * p3)
    bytes_accessed = (Bp * latent * 4 + Bp * p3 * 4
                      + sum(int(a.size) * a.dtype.itemsize for a in weight_args))

    call = pl.pallas_call(
        _decoder_kernel,
        out_shape=jax.ShapeDtypeStruct((Bp, p3), jnp.float32),
        grid_spec=grid_spec,
        compiler_params=pltpu.CompilerParams(
            dimension_semantics=("parallel",)),   # shard batch tiles across TCs
        cost_estimate=pl.CostEstimate(flops=flops, transcendentals=0,
                                      bytes_accessed=bytes_accessed),
    )

    out_dim, h3, w3 = consts["out_dim"], consts["h3"], consts["w3"]

    @jax.jit
    def forward(z):
        z_f32 = z.astype(jnp.float32)
        if Bp != B:  # only if B is not a tile multiple; fuses into this jit anyway
            z_f32 = jnp.pad(z_f32, ((0, Bp - B), (0, 0)))
        out_flat = call(z_f32, *weight_args)
        return out_flat[:B, :d3].reshape(B, out_dim, h3, w3)

    return forward


# ----------------------------------------------------------------------------
# Independent numpy reference (exact ConvTranspose2d semantics) for validation.
# ----------------------------------------------------------------------------
def _convt_ref(x, w, b, stride, pad):
    B, Ci, Hin, Win = x.shape
    _, Co, Kh, Kw = w.shape
    Hout = (Hin - 1) * stride - 2 * pad + Kh
    Wout = (Win - 1) * stride - 2 * pad + Kw
    out = np.zeros((B, Co, Hout, Wout), np.float32)
    for ci in range(Ci):
        for ih in range(Hin):
            for iw in range(Win):
                v = x[:, ci, ih, iw]                       # (B,)
                for kh in range(Kh):
                    oh = ih * stride - pad + kh
                    if oh < 0 or oh >= Hout:
                        continue
                    for kw in range(Kw):
                        ow = iw * stride - pad + kw
                        if ow < 0 or ow >= Wout:
                            continue
                        out[:, :, oh, ow] += v[:, None] * w[ci, :, kh, kw][None, :]
    return out + b.reshape(1, Co, 1, 1)


def _decoder_ref(z, params):
    fc1_w, fc1_b = (np.asarray(a, np.float32) for a in params["fc1"])
    h = np.maximum(np.asarray(z, np.float32) @ fc1_w + fc1_b, 0.0)  # relu(fc1(z))
    B = h.shape[0]
    x = h.reshape(B, 64, 1, 1)                                      # .view(-1, 64, w, h)
    x = np.maximum(
        _convt_ref(x, *(np.asarray(a, np.float32) for a in params["ct1"]), 2, 1), 0.0)
    x = np.maximum(
        _convt_ref(x, *(np.asarray(a, np.float32) for a in params["ct2"]), 2, 1), 0.0)
    x = _convt_ref(x, *(np.asarray(a, np.float32) for a in params["ct3"]), 1, 1)
    return x


if __name__ == "__main__":
    # w = h = 1 is the only configuration for which the torch forward runs.
    W_SP, H_SP = 1, 1
    LATENT_DIM = 16
    OUTPUT_DIM = 3
    BATCH = 256                       # amortizes resident weights over a real batch
    HIDDEN_DIM = W_SP * H_SP * 64     # = 64

    key = jax.random.PRNGKey(0)
    ks = jax.random.split(key, 9)
    params = {
        # fc1 stored as (in, out) so the kernel does z @ Wfc + b
        "fc1": (0.1 * jax.random.normal(ks[0], (LATENT_DIM, HIDDEN_DIM), jnp.float32),
                0.1 * jax.random.normal(ks[1], (HIDDEN_DIM,), jnp.float32)),
        # ConvTranspose2d weights in PyTorch layout (Ci, Co, Kh, Kw)
        "ct1": (0.1 * jax.random.normal(ks[2], (HIDDEN_DIM, 64, 4, 4), jnp.float32),
                0.1 * jax.random.normal(ks[3], (64,), jnp.float32)),
        "ct2": (0.1 * jax.random.normal(ks[4], (64, 32, 3, 3), jnp.float32),
                0.1 * jax.random.normal(ks[5], (32,), jnp.float32)),
        "ct3": (0.1 * jax.random.normal(ks[6], (32, OUTPUT_DIM, 3, 3), jnp.float32),
                0.1 * jax.random.normal(ks[7], (OUTPUT_DIM,), jnp.float32)),
    }
    z = jax.random.normal(ks[8], (BATCH, LATENT_DIM), jnp.float32)

    # One-time constant construction + jitted forward (hoisted out of the hot path).
    consts = build_decoder_constants(params, W_SP, H_SP, OUTPUT_DIM)
    decoder_forward = make_decoder_forward(consts, BATCH)

    out = jax.block_until_ready(decoder_forward(z))

    ref = _decoder_ref(z, params)
    assert out.shape == ref.shape == (BATCH, OUTPUT_DIM, 3, 3), (out.shape, ref.shape)
    # bf16 weights/activations in the matmul chain -> loosened tolerance vs f32 ref.
    np.testing.assert_allclose(np.asarray(out), ref, rtol=2e-2, atol=2e-2)
    print("KERNEL_OK")
</pallas_src>

<mosaic_0001>
module attributes {stable_mosaic.version = 11 : i64} {
  func.func @_decoder_kernel(%arg0: i32, %arg1: memref<256x16xf32, #tpu.memory_space<vmem>>, %arg2: memref<16x128xbf16, #tpu.memory_space<vmem>>, %arg3: memref<1x128xf32, #tpu.memory_space<vmem>>, %arg4: memref<128x384xbf16, #tpu.memory_space<vmem>>, %arg5: memref<384x384xbf16, #tpu.memory_space<vmem>>, %arg6: memref<384x128xbf16, #tpu.memory_space<vmem>>, %arg7: memref<256x128xf32, #tpu.memory_space<vmem>>) attributes {dimension_semantics = [#tpu.dimension_semantics<parallel>], iteration_bounds = array<i64: 1>, scalar_prefetch = 0 : i64, scratch_operands = 0 : i64, tpu.core_type = #tpu.core_type<tc>, window_params = [{transform_indices = @transform_0, window_bounds = array<i64: 256, 16>}, {pipeline_mode = #tpu.pipeline_mode<synchronous>, transform_indices = @transform_1, window_bounds = array<i64: 16, 128>}, {pipeline_mode = #tpu.pipeline_mode<synchronous>, transform_indices = @transform_2, window_bounds = array<i64: 1, 128>}, {pipeline_mode = #tpu.pipeline_mode<synchronous>, transform_indices = @transform_3, window_bounds = array<i64: 128, 384>}, {pipeline_mode = #tpu.pipeline_mode<synchronous>, transform_indices = @transform_4, window_bounds = array<i64: 384, 384>}, {pipeline_mode = #tpu.pipeline_mode<synchronous>, transform_indices = @transform_5, window_bounds = array<i64: 384, 128>}, {transform_indices = @transform_6, window_bounds = array<i64: 256, 128>}]} {
    %c0 = arith.constant 0 : index
    %c0_0 = arith.constant 0 : index
    %0 = vector.load %arg1[%c0, %c0_0] : memref<256x16xf32, #tpu.memory_space<vmem>>, vector<256x16xf32>
    %1 = arith.truncf %0 : vector<256x16xf32> to vector<256x16xbf16>
    %c0_1 = arith.constant 0 : index
    %c0_2 = arith.constant 0 : index
    %2 = vector.load %arg2[%c0_1, %c0_2] : memref<16x128xbf16, #tpu.memory_space<vmem>>, vector<16x128xbf16>
    %cst = arith.constant dense<0.000000e+00> : vector<256x128xf32>
    %3 = tpu.matmul %1, %2, %cst {dimension_numbers = #tpu.dot_dimension_numbers<[1], [0], [0], [1], [0, 0, 1, 1], [], []>} : vector<256x16xbf16>, vector<16x128xbf16>, vector<256x128xf32> -> vector<256x128xf32>
    %c0_3 = arith.constant 0 : index
    %c0_4 = arith.constant 0 : index
    %4 = vector.load %arg3[%c0_3, %c0_4] : memref<1x128xf32, #tpu.memory_space<vmem>>, vector<1x128xf32>
    %5 = vector.broadcast %4 : vector<1x128xf32> to vector<256x128xf32>
    %6 = arith.addf %3, %5 : vector<256x128xf32>
    %7 = arith.truncf %6 : vector<256x128xf32> to vector<256x128xbf16>
    %cst_5 = arith.constant 0.000000e+00 : bf16
    %8 = vector.broadcast %cst_5 : bf16 to vector<256x128xbf16>
    %9 = arith.maximumf %7, %8 : vector<256x128xbf16>
    %c0_6 = arith.constant 0 : index
    %c0_7 = arith.constant 0 : index
    %10 = vector.load %arg4[%c0_6, %c0_7] : memref<128x384xbf16, #tpu.memory_space<vmem>>, vector<128x384xbf16>
    %cst_8 = arith.constant dense<0.000000e+00> : vector<256x384xf32>
    %11 = tpu.matmul %9, %10, %cst_8 {dimension_numbers = #tpu.dot_dimension_numbers<[1], [0], [0], [1], [0, 0, 1, 1], [], []>} : vector<256x128xbf16>, vector<128x384xbf16>, vector<256x384xf32> -> vector<256x384xf32>
    %12 = arith.truncf %11 : vector<256x384xf32> to vector<256x384xbf16>
    %cst_9 = arith.constant 0.000000e+00 : bf16
    %13 = vector.broadcast %cst_9 : bf16 to vector<256x384xbf16>
    %14 = arith.maximumf %12, %13 : vector<256x384xbf16>
    %c0_10 = arith.constant 0 : index
    %c0_11 = arith.constant 0 : index
    %15 = vector.load %arg5[%c0_10, %c0_11] : memref<384x384xbf16, #tpu.memory_space<vmem>>, vector<384x384xbf16>
    %cst_12 = arith.constant dense<0.000000e+00> : vector<256x384xf32>
    %16 = tpu.matmul %14, %15, %cst_12 {dimension_numbers = #tpu.dot_dimension_numbers<[1], [0], [0], [1], [0, 0, 1, 1], [], []>} : vector<256x384xbf16>, vector<384x384xbf16>, vector<256x384xf32> -> vector<256x384xf32>
    %17 = arith.truncf %16 : vector<256x384xf32> to vector<256x384xbf16>
    %cst_13 = arith.constant 0.000000e+00 : bf16
    %18 = vector.broadcast %cst_13 : bf16 to vector<256x384xbf16>
    %19 = arith.maximumf %17, %18 : vector<256x384xbf16>
    %c0_14 = arith.constant 0 : index
    %c0_15 = arith.constant 0 : index
    %20 = vector.load %arg6[%c0_14, %c0_15] : memref<384x128xbf16, #tpu.memory_space<vmem>>, vector<384x128xbf16>
    %cst_16 = arith.constant dense<0.000000e+00> : vector<256x128xf32>
    %21 = tpu.matmul %19, %20, %cst_16 {dimension_numbers = #tpu.dot_dimension_numbers<[1], [0], [0], [1], [0, 0, 1, 1], [], []>} : vector<256x384xbf16>, vector<384x128xbf16>, vector<256x128xf32> -> vector<256x128xf32>
    %c0_17 = arith.constant 0 : index
    %c0_18 = arith.constant 0 : index
    %22 = vector.load %arg7[%c0_17, %c0_18] : memref<256x128xf32, #tpu.memory_space<vmem>>, vector<256x128xf32>
    tpu.vector_store %arg7[%c0_17, %c0_18], %21 {strides = array<i32>} : memref<256x128xf32, #tpu.memory_space<vmem>>, vector<256x128xf32>,
    return
  }
  func.func @transform_0(%arg0: i32) -> (i32, i32) {
    %c0_i32 = arith.constant 0 : i32
    %c0_i32_0 = arith.constant 0 : i32
    return %arg0, %c0_i32 : i32, i32
  }
  func.func @transform_1(%arg0: i32) -> (i32, i32) {
    %c0_i32 = arith.constant 0 : i32
    %c0_i32_0 = arith.constant 0 : i32
    %c0_i32_1 = arith.constant 0 : i32
    return %c0_i32, %c0_i32_0 : i32, i32
  }
  func.func @transform_2(%arg0: i32) -> (i32, i32) {
    %c0_i32 = arith.constant 0 : i32
    %c0_i32_0 = arith.constant 0 : i32
    %c0_i32_1 = arith.constant 0 : i32
    return %c0_i32, %c0_i32_0 : i32, i32
  }
  func.func @transform_3(%arg0: i32) -> (i32, i32) {
    %c0_i32 = arith.constant 0 : i32
    %c0_i32_0 = arith.constant 0 : i32
    %c0_i32_1 = arith.constant 0 : i32
    return %c0_i32, %c0_i32_0 : i32, i32
  }
  func.func @transform_4(%arg0: i32) -> (i32, i32) {
    %c0_i32 = arith.constant 0 : i32
    %c0_i32_0 = arith.constant 0 : i32
    %c0_i32_1 = arith.constant 0 : i32
    return %c0_i32, %c0_i32_0 : i32, i32
  }
  func.func @transform_5(%arg0: i32) -> (i32, i32) {
    %c0_i32 = arith.constant 0 : i32
    %c0_i32_0 = arith.constant 0 : i32
    %c0_i32_1 = arith.constant 0 : i32
    return %c0_i32, %c0_i32_0 : i32, i32
  }
  func.func @transform_6(%arg0: i32) -> (i32, i32) {
    %c0_i32 = arith.constant 0 : i32
    %c0_i32_0 = arith.constant 0 : i32
    return %arg0, %c0_i32 : i32, i32
  }
}

</mosaic_0001>

<llo_original>
// kernel: forward.1
$region0: #{forward.1}
  #allocation0 [shape = 'u32[]', space=smem, size = 0x4, offset = 0x4, fixed_abs, tag = 'smem constant byte address 0x4 - core index']
  #allocation1 [shape = 'u32[144,128]{1,0:T(1,128)}', space=vmem, size = 0x12000, scoped, tag = 'internal scratch']
  %s0 = inlined_call_operand.vmem [shape: f32[256,16], index: 0, kind: input, shape index: {}]
  %s1 = inlined_call_operand.vmem [shape: bf16[16,128], index: 1, kind: input, shape index: {}]
  %s2 = inlined_call_operand.vmem [shape: f32[1,128], index: 2, kind: input, shape index: {}]
  %s3 = inlined_call_operand.vmem [shape: bf16[128,384], index: 3, kind: input, shape index: {}]
  %s4 = inlined_call_operand.vmem [shape: bf16[384,384], index: 4, kind: input, shape index: {}]
  %s5 = inlined_call_operand.vmem [shape: bf16[384,128], index: 5, kind: input, shape index: {}]
  %s6 = inlined_call_operand.vmem [shape: f32[256,128], index: 6, kind: output, shape index: {}]
  %s7 = sld [smem:[#allocation0]]
  $region34: #{forward.1} parent=0
    _
  %s9 = ssub.s32 1, %s7
  %s10 = scalar_select 0, %s9, %s7
  // Predicated region
  $region2: #{forward.1} parent=0 // pred_check
    _
  $region3: #{forward.1} parent=0 // pred_check_branch
    %12 = sbr.rel (0) target = $region5
  $region4: #{forward.1} parent=0 // pred_region
    _
  $region5: #{forward.1} parent=0 // pred_fallthru
    _
  // Predicated region
  $region6: #{forward.1} parent=0 // pred_check
    _
  $region7: #{forward.1} parent=0 // pred_check_branch
    %14 = sbr.rel (0) target = $region9
  $region8: #{forward.1} parent=0 // pred_region
    _
  $region9: #{forward.1} parent=0 // pred_fallthru
    _
  // Predicated region
  $region10: #{forward.1} parent=0 // pred_check
    _
  $region11: #{forward.1} parent=0 // pred_check_branch
    %16 = sbr.rel (0) target = $region13
  $region12: #{forward.1} parent=0 // pred_region
    _
  $region13: #{forward.1} parent=0 // pred_fallthru
    _
  // Predicated region
  $region14: #{forward.1} parent=0 // pred_check
    _
  $region15: #{forward.1} parent=0 // pred_check_branch
    %18 = sbr.rel (0) target = $region17
  $region16: #{forward.1} parent=0 // pred_region
    _
  $region17: #{forward.1} parent=0 // pred_fallthru
    _
  // Predicated region
  $region18: #{forward.1} parent=0 // pred_check
    _
  $region19: #{forward.1} parent=0 // pred_check_branch
    %20 = sbr.rel (0) target = $region21
  $region20: #{forward.1} parent=0 // pred_region
    _
  $region21: #{forward.1} parent=0 // pred_fallthru
    _
  // Predicated region
  $region22: #{forward.1} parent=0 // pred_check
    _
  $region23: #{forward.1} parent=0 // pred_check_branch
    %22 = sbr.rel (0) target = $region25
  $region24: #{forward.1} parent=0 // pred_region
    _
  $region25: #{forward.1} parent=0 // pred_fallthru
    _
  %v24 = vld [vmem:[%s0] sm:$0xff]
  %v25 = vld [vmem:[%s0 + $0x8] sm:$0xff]
  %v26 = vld [vmem:[%s0 + $0x10] sm:$0xff]
  %v27 = vld [vmem:[%s0 + $0x18] sm:$0xff]
  %v28 = vld [vmem:[%s0 + $0x20] sm:$0xff]
  %v29 = vld [vmem:[%s0 + $0x28] sm:$0xff]
  %v30 = vld [vmem:[%s0 + $0x30] sm:$0xff]
  %v31 = vld [vmem:[%s0 + $0x38] sm:$0xff]
  %v32 = vld [vmem:[%s0 + $0x40] sm:$0xff]
  %v33 = vld [vmem:[%s0 + $0x48] sm:$0xff]
  %v34 = vld [vmem:[%s0 + $0x50] sm:$0xff]
  %v35 = vld [vmem:[%s0 + $0x58] sm:$0xff]
  %v36 = vld [vmem:[%s0 + $0x60] sm:$0xff]
  %v37 = vld [vmem:[%s0 + $0x68] sm:$0xff]
  %v38 = vld [vmem:[%s0 + $0x70] sm:$0xff]
  %v39 = vld [vmem:[%s0 + $0x78] sm:$0xff]
  %v40 = vld [vmem:[%s0 + $0x80] sm:$0xff]
  %v41 = vld [vmem:[%s0 + $0x88] sm:$0xff]
  %v42 = vld [vmem:[%s0 + $0x90] sm:$0xff]
  %v43 = vld [vmem:[%s0 + $0x98] sm:$0xff]
  %v44 = vld [vmem:[%s0 + $0xa0] sm:$0xff]
  %v45 = vld [vmem:[%s0 + $0xa8] sm:$0xff]
  %v46 = vld [vmem:[%s0 + $0xb0] sm:$0xff]
  %v47 = vld [vmem:[%s0 + $0xb8] sm:$0xff]
  %v48 = vld [vmem:[%s0 + $0xc0] sm:$0xff]
  %v49 = vld [vmem:[%s0 + $0xc8] sm:$0xff]
  %v50 = vld [vmem:[%s0 + $0xd0] sm:$0xff]
  %v51 = vld [vmem:[%s0 + $0xd8] sm:$0xff]
  %v52 = vld [vmem:[%s0 + $0xe0] sm:$0xff]
  %v53 = vld [vmem:[%s0 + $0xe8] sm:$0xff]
  %v54 = vld [vmem:[%s0 + $0xf0] sm:$0xff]
  %v55 = vld [vmem:[%s0 + $0xf8] sm:$0xff]
  %v56 = vpack.c.bf16 %v25, %v24
  %v57 = vpack.c.bf16 %v27, %v26
  %v58 = vpack.c.bf16 %v29, %v28
  %v59 = vpack.c.bf16 %v31, %v30
  %v60 = vpack.c.bf16 %v33, %v32
  %v61 = vpack.c.bf16 %v35, %v34
  %v62 = vpack.c.bf16 %v37, %v36
  %v63 = vpack.c.bf16 %v39, %v38
  %v64 = vpack.c.bf16 %v41, %v40
  %v65 = vpack.c.bf16 %v43, %v42
  %v66 = vpack.c.bf16 %v45, %v44
  %v67 = vpack.c.bf16 %v47, %v46
  %v68 = vpack.c.bf16 %v49, %v48
  %v69 = vpack.c.bf16 %v51, %v50
  %v70 = vpack.c.bf16 %v53, %v52
  %v71 = vpack.c.bf16 %v55, %v54
  %v72 = vld [vmem:[%s1] sm:$0xf]
  %v73 = vld [vmem:[%s1 + $0x4] sm:$0xf]
  %v74 = vld [vmem:[%s2] sm:$0x1]
  %v76 = vlaneseq
  %v77 = vshrl.u32 %v76, 7
  %v78 = vsub.s32 0, %v77
  %v79 = vrot.slane %v74, %v78
  %v83 = vunpack.c.l.b16 %v72
  %v84 = vunpack.c.l.b16 %v73
  %v85 = vpack.c.b16 %v84, %v83
  %vm87 = vcmask 130048
  %v89 = vsel %vm87, %v56, 0
  %v92 = vsel %vm87, %v57, 0
  %v95 = vsel %vm87, %v58, 0
  %v98 = vsel %vm87, %v59, 0
  %v101 = vsel %vm87, %v60, 0
  %v104 = vsel %vm87, %v61, 0
  %v107 = vsel %vm87, %v62, 0
  %v110 = vsel %vm87, %v63, 0
  %v113 = vsel %vm87, %v64, 0
  %v116 = vsel %vm87, %v65, 0
  %v119 = vsel %vm87, %v66, 0
  %v122 = vsel %vm87, %v67, 0
  %v125 = vsel %vm87, %v68, 0
  %v128 = vsel %vm87, %v69, 0
  %v131 = vsel %vm87, %v70, 0
  %v134 = vsel %vm87, %v71, 0
  %136 = vmatprep.subr.bf16.mxu0 0
  %137 = vmatpush1.bf16.msra.mxu0 %v85
  %138 = vmatprep.subr.bf16.mxu0 0
  %139 = vmatpush1.bf16.msra.mxu0 0
  %140 = vmatprep.subr.bf16.mxu0 0
  %141 = vmatpush1.bf16.msra.mxu0 0
  %142 = vmatprep.subr.bf16.mxu0 0
  %143 = vmatpush1.bf16.msra.mxu0 0
  %144 = vmatprep.subr.bf16.mxu0 0
  %145 = vmatpush1.bf16.msra.mxu0 0
  %146 = vmatprep.subr.bf16.mxu0 0
  %147 = vmatpush1.bf16.msra.mxu0 0
  %148 = vmatprep.subr.bf16.mxu0 0
  %149 = vmatpush1.bf16.msra.mxu0 0
  %150 = vmatprep.subr.bf16.mxu0 0
  %151 = vmatpush1.bf16.msra.mxu0 0
  %152 = vmatprep.subr.bf16.mxu0 0
  %153 = vmatpush1.bf16.msra.mxu0 0
  %154 = vmatprep.subr.bf16.mxu0 0
  %155 = vmatpush1.bf16.msra.mxu0 0
  %156 = vmatprep.subr.bf16.mxu0 0
  %157 = vmatpush1.bf16.msra.mxu0 0
  %158 = vmatprep.subr.bf16.mxu0 0
  %159 = vmatpush1.bf16.msra.mxu0 0
  %160 = vmatprep.subr.bf16.mxu0 0
  %161 = vmatpush1.bf16.msra.mxu0 0
  %162 = vmatprep.subr.bf16.mxu0 0
  %163 = vmatpush1.bf16.msra.mxu0 0
  %164 = vmatprep.subr.bf16.mxu0 0
  %165 = vmatpush1.bf16.msra.mxu0 0
  %166 = vmatprep.subr.bf16.mxu0 0
  %167 = vmatpush1.bf16.msra.mxu0 0
  %168 = vmatprep.mubr.bf16.mxu0 0
  %169 = vmatmul.mubr.bf16.gmra.mrb[0].mxu0 %v89
  %v170 = vpop.f32.mrb[0].mxu0
  %v171 = vadd.f32 %v79, %v170
  %v172 = vpop.f32.mrb[0].mxu0
  %v173 = vpop.f32.mrb[0].mxu0
  %v174 = vadd.f32 %v79, %v173
  %v175 = vpop.f32.mrb[0].mxu0
  %176 = vmatprep.mubr.bf16.mxu0 0
  %177 = vmatmul.mubr.bf16.gmra.mrb[0].mxu0 %v92
  %v178 = vpop.f32.mrb[0].mxu0
  %v179 = vadd.f32 %v79, %v178
  %v180 = vpop.f32.mrb[0].mxu0
  %v181 = vpop.f32.mrb[0].mxu0
  %v182 = vadd.f32 %v79, %v181
  %v183 = vpop.f32.mrb[0].mxu0
  %184 = vmatprep.mubr.bf16.mxu0 0
  %185 = vmatmul.mubr.bf16.gmra.mrb[0].mxu0 %v95
  %v186 = vpop.f32.mrb[0].mxu0
  %v187 = vadd.f32 %v79, %v186
  %v188 = vpop.f32.mrb[0].mxu0
  %v189 = vpop.f32.mrb[0].mxu0
  %v190 = vadd.f32 %v79, %v189
  %v191 = vpop.f32.mrb[0].mxu0
  %192 = vmatprep.mubr.bf16.mxu0 0
  %193 = vmatmul.mubr.bf16.gmra.mrb[0].mxu0 %v98
  %v194 = vpop.f32.mrb[0].mxu0
  %v195 = vadd.f32 %v79, %v194
  %v196 = vpop.f32.mrb[0].mxu0
  %v197 = vpop.f32.mrb[0].mxu0
  %v198 = vadd.f32 %v79, %v197
  %v199 = vpop.f32.mrb[0].mxu0
  %200 = vmatprep.mubr.bf16.mxu0 0
  %201 = vmatmul.mubr.bf16.gmra.mrb[0].mxu0 %v101
  %v202 = vpop.f32.mrb[0].mxu0
  %v203 = vadd.f32 %v79, %v202
  %v204 = vpop.f32.mrb[0].mxu0
  %v205 = vpop.f32.mrb[0].mxu0
  %v206 = vadd.f32 %v79, %v205
  %v207 = vpop.f32.mrb[0].mxu0
  %208 = vmatprep.mubr.bf16.mxu0 0
  %209 = vmatmul.mubr.bf16.gmra.mrb[0].mxu0 %v104
  %v210 = vpop.f32.mrb[0].mxu0
  %v211 = vadd.f32 %v79, %v210
  %v212 = vpop.f32.mrb[0].mxu0
  %v213 = vpop.f32.mrb[0].mxu0
  %v214 = vadd.f32 %v79, %v213
  %v215 = vpop.f32.mrb[0].mxu0
  %216 = vmatprep.mubr.bf16.mxu0 0
  %217 = vmatmul.mubr.bf16.gmra.mrb[0].mxu0 %v107
  %v218 = vpop.f32.mrb[0].mxu0
  %v219 = vadd.f32 %v79, %v218
  %v220 = vpop.f32.mrb[0].mxu0
  %v221 = vpop.f32.mrb[0].mxu0
  %v222 = vadd.f32 %v79, %v221
  %v223 = vpop.f32.mrb[0].mxu0
  %224 = vmatprep.mubr.bf16.mxu0 0
  %225 = vmatmul.mubr.bf16.gmra.mrb[0].mxu0 %v110
  %v226 = vpop.f32.mrb[0].mxu0
  %v227 = vadd.f32 %v79, %v226
  %v228 = vpop.f32.mrb[0].mxu0
  %v229 = vpop.f32.mrb[0].mxu0
  %v230 = vadd.f32 %v79, %v229
  %v231 = vpop.f32.mrb[0].mxu0
  %232 = vmatprep.mubr.bf16.mxu0 0
  %233 = vmatmul.mubr.bf16.gmra.mrb[0].mxu0 %v113
  %v234 = vpop.f32.mrb[0].mxu0
  %v235 = vadd.f32 %v79, %v234
  %v236 = vpop.f32.mrb[0].mxu0
  %v237 = vpop.f32.mrb[0].mxu0
  %v238 = vadd.f32 %v79, %v237
  %v239 = vpop.f32.mrb[0].mxu0
  %240 = vmatprep.mubr.bf16.mxu0 0
  %241 = vmatmul.mubr.bf16.gmra.mrb[0].mxu0 %v116
  %v242 = vpop.f32.mrb[0].mxu0
  %v243 = vadd.f32 %v79, %v242
  %v244 = vpop.f32.mrb[0].mxu0
  %v245 = vpop.f32.mrb[0].mxu0
  %v246 = vadd.f32 %v79, %v245
  %v247 = vpop.f32.mrb[0].mxu0
  %248 = vmatprep.mubr.bf16.mxu0 0
  %249 = vmatmul.mubr.bf16.gmra.mrb[0].mxu0 %v119
  %v250 = vpop.f32.mrb[0].mxu0
  %v251 = vadd.f32 %v79, %v250
  %v252 = vpop.f32.mrb[0].mxu0
  %v253 = vpop.f32.mrb[0].mxu0
  %v254 = vadd.f32 %v79, %v253
  %v255 = vpop.f32.mrb[0].mxu0
  %256 = vmatprep.mubr.bf16.mxu0 0
  %257 = vmatmul.mubr.bf16.gmra.mrb[0].mxu0 %v122
  %v258 = vpop.f32.mrb[0].mxu0
  %v259 = vadd.f32 %v79, %v258
  %v260 = vpop.f32.mrb[0].mxu0
  %v261 = vpop.f32.mrb[0].mxu0
  %v262 = vadd.f32 %v79, %v261
  %v263 = vpop.f32.mrb[0].mxu0
  %264 = vmatprep.mubr.bf16.mxu0 0
  %265 = vmatmul.mubr.bf16.gmra.mrb[0].mxu0 %v125
  %v266 = vpop.f32.mrb[0].mxu0
  %v267 = vadd.f32 %v79, %v266
  %v268 = vpop.f32.mrb[0].mxu0
  %v269 = vpop.f32.mrb[0].mxu0
  %v270 = vadd.f32 %v79, %v269
  %v271 = vpop.f32.mrb[0].mxu0
  %272 = vmatprep.mubr.bf16.mxu0 0
  %273 = vmatmul.mubr.bf16.gmra.mrb[0].mxu0 %v128
  %v274 = vpop.f32.mrb[0].mxu0
  %v275 = vadd.f32 %v79, %v274
  %v276 = vpop.f32.mrb[0].mxu0
  %v277 = vpop.f32.mrb[0].mxu0
  %v278 = vadd.f32 %v79, %v277
  %v279 = vpop.f32.mrb[0].mxu0
  %280 = vmatprep.mubr.bf16.mxu0 0
  %281 = vmatmul.mubr.bf16.gmra.mrb[0].mxu0 %v131
  %v282 = vpop.f32.mrb[0].mxu0
  %v283 = vadd.f32 %v79, %v282
  %v284 = vpop.f32.mrb[0].mxu0
  %v285 = vpop.f32.mrb[0].mxu0
  %v286 = vadd.f32 %v79, %v285
  %v287 = vpop.f32.mrb[0].mxu0
  %288 = vmatprep.mubr.bf16.mxu0 0
  %289 = vmatmul.mubr.bf16.gmra.mrb[0].mxu0 %v134
  %v290 = vpop.f32.mrb[0].mxu0
  %v291 = vadd.f32 %v79, %v290
  %v292 = vpop.f32.mrb[0].mxu0
  %v293 = vpop.f32.mrb[0].mxu0
  %v294 = vadd.f32 %v79, %v293
  %v295 = vpop.f32.mrb[0].mxu0
  %296 = vdwg.mxu0
  %v297 = vpack.c.bf16 %v174, %v171
  %v298 = vpack.c.bf16 %v182, %v179
  %v299 = vpack.c.bf16 %v190, %v187
  %v300 = vpack.c.bf16 %v198, %v195
  %v301 = vpack.c.bf16 %v206, %v203
  %v302 = vpack.c.bf16 %v214, %v211
  %v303 = vpack.c.bf16 %v222, %v219
  %v304 = vpack.c.bf16 %v230, %v227
  %v305 = vpack.c.bf16 %v238, %v235
  %v306 = vpack.c.bf16 %v246, %v243
  %v307 = vpack.c.bf16 %v254, %v251
  %v308 = vpack.c.bf16 %v262, %v259
  %v309 = vpack.c.bf16 %v270, %v267
  %v310 = vpack.c.bf16 %v278, %v275
  %v311 = vpack.c.bf16 %v286, %v283
  %v312 = vpack.c.bf16 %v294, %v291
  %v313 = vmax.bf16 %v297, 0
  %v314 = vmax.bf16 %v298, 0
  %v315 = vmax.bf16 %v299, 0
  %v316 = vmax.bf16 %v300, 0
  %v317 = vmax.bf16 %v301, 0
  %v318 = vmax.bf16 %v302, 0
  %v319 = vmax.bf16 %v303, 0
  %v320 = vmax.bf16 %v304, 0
  %v321 = vmax.bf16 %v305, 0
  %v322 = vmax.bf16 %v306, 0
  %v323 = vmax.bf16 %v307, 0
  %v324 = vmax.bf16 %v308, 0
  %v325 = vmax.bf16 %v309, 0
  %v326 = vmax.bf16 %v310, 0
  %v327 = vmax.bf16 %v311, 0
  %v328 = vmax.bf16 %v312, 0
  %v329 = vld [vmem:[%s3] sm:$0xff]
  %v330 = vld [vmem:[%s3 + $0x8] sm:$0xf]
  %v331 = vld [vmem:[%s3 + $0xc] sm:$0xff]
  %v332 = vld [vmem:[%s3 + $0x14] sm:$0xf]
  %v333 = vld [vmem:[%s3 + $0x18] sm:$0xff]
  %v334 = vld [vmem:[%s3 + $0x20] sm:$0xf]
  %v335 = vld [vmem:[%s3 + $0x24] sm:$0xff]
  %v336 = vld [vmem:[%s3 + $0x2c] sm:$0xf]
  %v337 = vld [vmem:[%s3 + $0x30] sm:$0xff]
  %v338 = vld [vmem:[%s3 + $0x38] sm:$0xf]
  %v339 = vld [vmem:[%s3 + $0x3c] sm:$0xff]
  %v340 = vld [vmem:[%s3 + $0x44] sm:$0xf]
  %v341 = vld [vmem:[%s3 + $0x48] sm:$0xff]
  %v342 = vld [vmem:[%s3 + $0x50] sm:$0xf]
  %v343 = vld [vmem:[%s3 + $0x54] sm:$0xff]
  %v344 = vld [vmem:[%s3 + $0x5c] sm:$0xf]
  %v345 = vld [vmem:[%s3 + $0x60] sm:$0xff]
  %v346 = vld [vmem:[%s3 + $0x68] sm:$0xf]
  %v347 = vld [vmem:[%s3 + $0x6c] sm:$0xff]
  %v348 = vld [vmem:[%s3 + $0x74] sm:$0xf]
  %v349 = vld [vmem:[%s3 + $0x78] sm:$0xff]
  %v350 = vld [vmem:[%s3 + $0x80] sm:$0xf]
  %v351 = vld [vmem:[%s3 + $0x84] sm:$0xff]
  %v352 = vld [vmem:[%s3 + $0x8c] sm:$0xf]
  %v353 = vld [vmem:[%s3 + $0x90] sm:$0xff]
  %v354 = vld [vmem:[%s3 + $0x98] sm:$0xf]
  %v355 = vld [vmem:[%s3 + $0x9c] sm:$0xff]
  %v356 = vld [vmem:[%s3 + $0xa4] sm:$0xf]
  %v357 = vld [vmem:[%s3 + $0xa8] sm:$0xff]
  %v358 = vld [vmem:[%s3 + $0xb0] sm:$0xf]
  %v359 = vld [vmem:[%s3 + $0xb4] sm:$0xff]
  %v360 = vld [vmem:[%s3 + $0xbc] sm:$0xf]
  %v393 = vunpack.c.l.b16 %v329
  %v394 = vunpack.c.h.b16 %v329
  %v395 = vunpack.c.l.b16 %v330
  %v396 = vunpack.c.l.b16 %v331
  %v397 = vunpack.c.h.b16 %v331
  %v398 = vunpack.c.l.b16 %v332
  %v399 = vunpack.c.l.b16 %v333
  %v400 = vunpack.c.h.b16 %v333
  %v401 = vunpack.c.l.b16 %v334
  %v402 = vunpack.c.l.b16 %v335
  %v403 = vunpack.c.h.b16 %v335
  %v404 = vunpack.c.l.b16 %v336
  %v405 = vunpack.c.l.b16 %v337
  %v406 = vunpack.c.h.b16 %v337
  %v407 = vunpack.c.l.b16 %v338
  %v408 = vunpack.c.l.b16 %v339
  %v409 = vunpack.c.h.b16 %v339
  %v410 = vunpack.c.l.b16 %v340
  %v411 = vunpack.c.l.b16 %v341
  %v412 = vunpack.c.h.b16 %v341
  %v413 = vunpack.c.l.b16 %v342
  %v414 = vunpack.c.l.b16 %v343
  %v415 = vunpack.c.h.b16 %v343
  %v416 = vunpack.c.l.b16 %v344
  %v417 = vunpack.c.l.b16 %v345
  %v418 = vunpack.c.h.b16 %v345
  %v419 = vunpack.c.l.b16 %v346
  %v420 = vunpack.c.l.b16 %v347
  %v421 = vunpack.c.h.b16 %v347
  %v422 = vunpack.c.l.b16 %v348
  %v423 = vunpack.c.l.b16 %v349
  %v424 = vunpack.c.h.b16 %v349
  %v425 = vunpack.c.l.b16 %v350
  %v426 = vunpack.c.l.b16 %v351
  %v427 = vunpack.c.h.b16 %v351
  %v428 = vunpack.c.l.b16 %v352
  %v429 = vunpack.c.l.b16 %v353
  %v430 = vunpack.c.h.b16 %v353
  %v431 = vunpack.c.l.b16 %v354
  %v432 = vunpack.c.l.b16 %v355
  %v433 = vunpack.c.h.b16 %v355
  %v434 = vunpack.c.l.b16 %v356
  %v435 = vunpack.c.l.b16 %v357
  %v436 = vunpack.c.h.b16 %v357
  %v437 = vunpack.c.l.b16 %v358
  %v438 = vunpack.c.l.b16 %v359
  %v439 = vunpack.c.h.b16 %v359
  %v440 = vunpack.c.l.b16 %v360
  %v441 = vpack.c.b16 %v396, %v393
  %v442 = vpack.c.b16 %v397, %v394
  %v443 = vpack.c.b16 %v398, %v395
  %v444 = vpack.c.b16 %v402, %v399
  %v445 = vpack.c.b16 %v403, %v400
  %v446 = vpack.c.b16 %v404, %v401
  %v447 = vpack.c.b16 %v408, %v405
  %v448 = vpack.c.b16 %v409, %v406
  %v449 = vpack.c.b16 %v410, %v407
  %v450 = vpack.c.b16 %v414, %v411
  %v451 = vpack.c.b16 %v415, %v412
  %v452 = vpack.c.b16 %v416, %v413
  %v453 = vpack.c.b16 %v420, %v417
  %v454 = vpack.c.b16 %v421, %v418
  %v455 = vpack.c.b16 %v422, %v419
  %v456 = vpack.c.b16 %v426, %v423
  %v457 = vpack.c.b16 %v427, %v424
  %v458 = vpack.c.b16 %v428, %v425
  %v459 = vpack.c.b16 %v432, %v429
  %v460 = vpack.c.b16 %v433, %v430
  %v461 = vpack.c.b16 %v434, %v431
  %v462 = vpack.c.b16 %v438, %v435
  %v463 = vpack.c.b16 %v439, %v436
  %v464 = vpack.c.b16 %v440, %v437
  %489 = vmatprep.subr.bf16.mxu0 %v442
  %490 = vmatpush1.bf16.msra.mxu0 %v441
  %491 = vmatprep.subr.bf16.mxu0 %v445
  %492 = vmatpush1.bf16.msra.mxu0 %v444
  %493 = vmatprep.subr.bf16.mxu0 %v448
  %494 = vmatpush1.bf16.msra.mxu0 %v447
  %495 = vmatprep.subr.bf16.mxu0 %v451
  %496 = vmatpush1.bf16.msra.mxu0 %v450
  %497 = vmatprep.subr.bf16.mxu0 %v454
  %498 = vmatpush1.bf16.msra.mxu0 %v453
  %499 = vmatprep.subr.bf16.mxu0 %v457
  %500 = vmatpush1.bf16.msra.mxu0 %v456
  %501 = vmatprep.subr.bf16.mxu0 %v460
  %502 = vmatpush1.bf16.msra.mxu0 %v459
  %503 = vmatprep.subr.bf16.mxu0 %v463
  %504 = vmatpush1.bf16.msra.mxu0 %v462
  %505 = vmatprep.subr.bf16.mxu0 0
  %506 = vmatpush1.bf16.msra.mxu0 0
  %507 = vmatprep.subr.bf16.mxu0 0
  %508 = vmatpush1.bf16.msra.mxu0 0
  %509 = vmatprep.subr.bf16.mxu0 0
  %510 = vmatpush1.bf16.msra.mxu0 0
  %511 = vmatprep.subr.bf16.mxu0 0
  %512 = vmatpush1.bf16.msra.mxu0 0
  %513 = vmatprep.subr.bf16.mxu0 0
  %514 = vmatpush1.bf16.msra.mxu0 0
  %515 = vmatprep.subr.bf16.mxu0 0
  %516 = vmatpush1.bf16.msra.mxu0 0
  %517 = vmatprep.subr.bf16.mxu0 0
  %518 = vmatpush1.bf16.msra.mxu0 0
  %519 = vmatprep.subr.bf16.mxu0 0
  %520 = vmatpush1.bf16.msra.mxu0 0
  %521 = vmatprep.mubr.bf16.mxu0 0
  %522 = vmatmul.mubr.bf16.gmra.mrb[0].mxu0 %v313
  %v523 = vpop.f32.mrb[0].mxu0
  %v524 = vadd.f32 0.0, %v523
  %v525 = vpop.f32.mrb[0].mxu0
  %v526 = vadd.f32 0.0, %v525
  %v527 = vpop.f32.mrb[0].mxu0
  %v528 = vadd.f32 0.0, %v527
  %v529 = vpop.f32.mrb[0].mxu0
  %v530 = vadd.f32 0.0, %v529
  %531 = vmatprep.mubr.bf16.mxu0 0
  %532 = vmatmul.mubr.bf16.gmra.mrb[0].mxu0 %v314
  %v533 = vpop.f32.mrb[0].mxu0
  %v534 = vadd.f32 0.0, %v533
  %v535 = vpop.f32.mrb[0].mxu0
  %v536 = vadd.f32 0.0, %v535
  %v537 = vpop.f32.mrb[0].mxu0
  %v538 = vadd.f32 0.0, %v537
  %v539 = vpop.f32.mrb[0].mxu0
  %v540 = vadd.f32 0.0, %v539
  %541 = vmatprep.mubr.bf16.mxu0 0
  %542 = vmatmul.mubr.bf16.gmra.mrb[0].mxu0 %v315
  %v543 = vpop.f32.mrb[0].mxu0
  %v544 = vadd.f32 0.0, %v543
  %v545 = vpop.f32.mrb[0].mxu0
  %v546 = vadd.f32 0.0, %v545
  %v547 = vpop.f32.mrb[0].mxu0
  %v548 = vadd.f32 0.0, %v547
  %v549 = vpop.f32.mrb[0].mxu0
  %v550 = vadd.f32 0.0, %v549
  %551 = vmatprep.mubr.bf16.mxu0 0
  %552 = vmatmul.mubr.bf16.gmra.mrb[0].mxu0 %v316
  %v553 = vpop.f32.mrb[0].mxu0
  %v554 = vadd.f32 0.0, %v553
  %v555 = vpop.f32.mrb[0].mxu0
  %v556 = vadd.f32 0.0, %v555
  %v557 = vpop.f32.mrb[0].mxu0
  %v558 = vadd.f32 0.0, %v557
  %v559 = vpop.f32.mrb[0].mxu0
  %v560 = vadd.f32 0.0, %v559
  %561 = vmatprep.mubr.bf16.mxu0 0
  %562 = vmatmul.mubr.bf16.gmra.mrb[0].mxu0 %v317
  %v563 = vpop.f32.mrb[0].mxu0
  %v564 = vadd.f32 0.0, %v563
  %v565 = vpop.f32.mrb[0].mxu0
  %v566 = vadd.f32 0.0, %v565
  %v567 = vpop.f32.mrb[0].mxu0
  %v568 = vadd.f32 0.0, %v567
  %v569 = vpop.f32.mrb[0].mxu0
  %v570 = vadd.f32 0.0, %v569
  %571 = vmatprep.mubr.bf16.mxu0 0
  %572 = vmatmul.mubr.bf16.gmra.mrb[0].mxu0 %v318
  %v573 = vpop.f32.mrb[0].mxu0
  %v574 = vadd.f32 0.0, %v573
  %v575 = vpop.f32.mrb[0].mxu0
  %v576 = vadd.f32 0.0, %v575
  %v577 = vpop.f32.mrb[0].mxu0
  %v578 = vadd.f32 0.0, %v577
  %v579 = vpop.f32.mrb[0].mxu0
  %v580 = vadd.f32 0.0, %v579
  %581 = vmatprep.mubr.bf16.mxu0 0
  %582 = vmatmul.mubr.bf16.gmra.mrb[0].mxu0 %v319
  %v583 = vpop.f32.mrb[0].mxu0
  %v584 = vadd.f32 0.0, %v583
  %v585 = vpop.f32.mrb[0].mxu0
  %v586 = vadd.f32 0.0, %v585
  %v587 = vpop.f32.mrb[0].mxu0
  %v588 = vadd.f32 0.0, %v587
  %v589 = vpop.f32.mrb[0].mxu0
  %v590 = vadd.f32 0.0, %v589
  %591 = vmatprep.mubr.bf16.mxu0 0
  %592 = vmatmul.mubr.bf16.gmra.mrb[0].mxu0 %v320
  %v593 = vpop.f32.mrb[0].mxu0
  %v594 = vadd.f32 0.0, %v593
  %v595 = vpop.f32.mrb[0].mxu0
  %v596 = vadd.f32 0.0, %v595
  %v597 = vpop.f32.mrb[0].mxu0
  %v598 = vadd.f32 0.0, %v597
  %v599 = vpop.f32.mrb[0].mxu0
  %v600 = vadd.f32 0.0, %v599
  %601 = vmatprep.mubr.bf16.mxu0 0
  %602 = vmatmul.mubr.bf16.gmra.mrb[0].mxu0 %v321
  %v603 = vpop.f32.mrb[0].mxu0
  %v604 = vadd.f32 0.0, %v603
  %v605 = vpop.f32.mrb[0].mxu0
  %v606 = vadd.f32 0.0, %v605
  %v607 = vpop.f32.mrb[0].mxu0
  %v608 = vadd.f32 0.0, %v607
  %v609 = vpop.f32.mrb[0].mxu0
  %v610 = vadd.f32 0.0, %v609
  %611 = vmatprep.mubr.bf16.mxu0 0
  %612 = vmatmul.mubr.bf16.gmra.mrb[0].mxu0 %v322
  %v613 = vpop.f32.mrb[0].mxu0
  %v614 = vadd.f32 0.0, %v613
  %v615 = vpop.f32.mrb[0].mxu0
  %v616 = vadd.f32 0.0, %v615
  %v617 = vpop.f32.mrb[0].mxu0
  %v618 = vadd.f32 0.0, %v617
  %v619 = vpop.f32.mrb[0].mxu0
  %v620 = vadd.f32 0.0, %v619
  %621 = vmatprep.mubr.bf16.mxu0 0
  %622 = vmatmul.mubr.bf16.gmra.mrb[0].mxu0 %v323
  %v623 = vpop.f32.mrb[0].mxu0
  %v624 = vadd.f32 0.0, %v623
  %v625 = vpop.f32.mrb[0].mxu0
  %v626 = vadd.f32 0.0, %v625
  %v627 = vpop.f32.mrb[0].mxu0
  %v628 = vadd.f32 0.0, %v627
  %v629 = vpop.f32.mrb[0].mxu0
  %v630 = vadd.f32 0.0, %v629
  %631 = vmatprep.mubr.bf16.mxu0 0
  %632 = vmatmul.mubr.bf16.gmra.mrb[0].mxu0 %v324
  %v633 = vpop.f32.mrb[0].mxu0
  %v634 = vadd.f32 0.0, %v633
  %v635 = vpop.f32.mrb[0].mxu0
  %v636 = vadd.f32 0.0, %v635
  %v637 = vpop.f32.mrb[0].mxu0
  %v638 = vadd.f32 0.0, %v637
  %v639 = vpop.f32.mrb[0].mxu0
  %v640 = vadd.f32 0.0, %v639
  %641 = vmatprep.mubr.bf16.mxu0 0
  %642 = vmatmul.mubr.bf16.gmra.mrb[0].mxu0 %v325
  %v643 = vpop.f32.mrb[0].mxu0
  %v644 = vadd.f32 0.0, %v643
  %v645 = vpop.f32.mrb[0].mxu0
  %v646 = vadd.f32 0.0, %v645
  %v647 = vpop.f32.mrb[0].mxu0
  %v648 = vadd.f32 0.0, %v647
  %v649 = vpop.f32.mrb[0].mxu0
  %v650 = vadd.f32 0.0, %v649
  %651 = vmatprep.mubr.bf16.mxu0 0
  %652 = vmatmul.mubr.bf16.gmra.mrb[0].mxu0 %v326
  %v653 = vpop.f32.mrb[0].mxu0
  %v654 = vadd.f32 0.0, %v653
  %v655 = vpop.f32.mrb[0].mxu0
  %v656 = vadd.f32 0.0, %v655
  %v657 = vpop.f32.mrb[0].mxu0
  %v658 = vadd.f32 0.0, %v657
  %v659 = vpop.f32.mrb[0].mxu0
  %v660 = vadd.f32 0.0, %v659
  %661 = vmatprep.mubr.bf16.mxu0 0
  %662 = vmatmul.mubr.bf16.gmra.mrb[0].mxu0 %v327
  %v663 = vpop.f32.mrb[0].mxu0
  %v664 = vadd.f32 0.0, %v663
  %v665 = vpop.f32.mrb[0].mxu0
  %v666 = vadd.f32 0.0, %v665
  %v667 = vpop.f32.mrb[0].mxu0
  %v668 = vadd.f32 0.0, %v667
  %v669 = vpop.f32.mrb[0].mxu0
  %v670 = vadd.f32 0.0, %v669
  %671 = vmatprep.mubr.bf16.mxu0 0
  %672 = vmatmul.mubr.bf16.gmra.mrb[0].mxu0 %v328
  %v673 = vpop.f32.mrb[0].mxu0
  %v674 = vadd.f32 0.0, %v673
  %v675 = vpop.f32.mrb[0].mxu0
  %v676 = vadd.f32 0.0, %v675
  %v677 = vpop.f32.mrb[0].mxu0
  %v678 = vadd.f32 0.0, %v677
  %v679 = vpop.f32.mrb[0].mxu0
  %v680 = vadd.f32 0.0, %v679
  %681 = vdwg.mxu0
  %682 = vmatprep.subr.bf16.mxu0 0
  %683 = vmatpush1.bf16.msra.mxu0 %v443
  %684 = vmatprep.subr.bf16.mxu0 0
  %685 = vmatpush1.bf16.msra.mxu0 %v446
  %686 = vmatprep.subr.bf16.mxu0 0
  %687 = vmatpush1.bf16.msra.mxu0 %v449
  %688 = vmatprep.subr.bf16.mxu0 0
  %689 = vmatpush1.bf16.msra.mxu0 %v452
  %690 = vmatprep.subr.bf16.mxu0 0
  %691 = vmatpush1.bf16.msra.mxu0 %v455
  %692 = vmatprep.subr.bf16.mxu0 0
  %693 = vmatpush1.bf16.msra.mxu0 %v458
  %694 = vmatprep.subr.bf16.mxu0 0
  %695 = vmatpush1.bf16.msra.mxu0 %v461
  %696 = vmatprep.subr.bf16.mxu0 0
  %697 = vmatpush1.bf16.msra.mxu0 %v464
  %698 = vmatprep.subr.bf16.mxu0 0
  %699 = vmatpush1.bf16.msra.mxu0 0
  %700 = vmatprep.subr.bf16.mxu0 0
  %701 = vmatpush1.bf16.msra.mxu0 0
  %702 = vmatprep.subr.bf16.mxu0 0
  %703 = vmatpush1.bf16.msra.mxu0 0
  %704 = vmatprep.subr.bf16.mxu0 0
  %705 = vmatpush1.bf16.msra.mxu0 0
  %706 = vmatprep.subr.bf16.mxu0 0
  %707 = vmatpush1.bf16.msra.mxu0 0
  %708 = vmatprep.subr.bf16.mxu0 0
  %709 = vmatpush1.bf16.msra.mxu0 0
  %710 = vmatprep.subr.bf16.mxu0 0
  %711 = vmatpush1.bf16.msra.mxu0 0
  %712 = vmatprep.subr.bf16.mxu0 0
  %713 = vmatpush1.bf16.msra.mxu0 0
  %714 = vmatprep.mubr.bf16.mxu0 0
  %715 = vmatmul.mubr.bf16.gmra.mrb[0].mxu0 %v313
  %v716 = vpop.f32.mrb[0].mxu0
  %v717 = vadd.f32 0.0, %v716
  %v718 = vpop.f32.mrb[0].mxu0
  %v719 = vpop.f32.mrb[0].mxu0
  %v720 = vadd.f32 0.0, %v719
  %v721 = vpop.f32.mrb[0].mxu0
  %722 = vmatprep.mubr.bf16.mxu0 0
  %723 = vmatmul.mubr.bf16.gmra.mrb[0].mxu0 %v314
  %v724 = vpop.f32.mrb[0].mxu0
  %v725 = vadd.f32 0.0, %v724
  %v726 = vpop.f32.mrb[0].mxu0
  %v727 = vpop.f32.mrb[0].mxu0
  %v728 = vadd.f32 0.0, %v727
  %v729 = vpop.f32.mrb[0].mxu0
  %730 = vmatprep.mubr.bf16.mxu0 0
  %731 = vmatmul.mubr.bf16.gmra.mrb[0].mxu0 %v315
  %v732 = vpop.f32.mrb[0].mxu0
  %v733 = vadd.f32 0.0, %v732
  %v734 = vpop.f32.mrb[0].mxu0
  %v735 = vpop.f32.mrb[0].mxu0
  %v736 = vadd.f32 0.0, %v735
  %v737 = vpop.f32.mrb[0].mxu0
  %738 = vmatprep.mubr.bf16.mxu0 0
  %739 = vmatmul.mubr.bf16.gmra.mrb[0].mxu0 %v316
  %v740 = vpop.f32.mrb[0].mxu0
  %v741 = vadd.f32 0.0, %v740
  %v742 = vpop.f32.mrb[0].mxu0
  %v743 = vpop.f32.mrb[0].mxu0
  %v744 = vadd.f32 0.0, %v743
  %v745 = vpop.f32.mrb[0].mxu0
  %746 = vmatprep.mubr.bf16.mxu0 0
  %747 = vmatmul.mubr.bf16.gmra.mrb[0].mxu0 %v317
  %v748 = vpop.f32.mrb[0].mxu0
  %v749 = vadd.f32 0.0, %v748
  %v750 = vpop.f32.mrb[0].mxu0
  %v751 = vpop.f32.mrb[0].mxu0
  %v752 = vadd.f32 0.0, %v751
  %v753 = vpop.f32.mrb[0].mxu0
  %754 = vmatprep.mubr.bf16.mxu0 0
  %755 = vmatmul.mubr.bf16.gmra.mrb[0].mxu0 %v318
  %v756 = vpop.f32.mrb[0].mxu0
  %v757 = vadd.f32 0.0, %v756
  %v758 = vpop.f32.mrb[0].mxu0
  %v759 = vpop.f32.mrb[0].mxu0
  %v760 = vadd.f32 0.0, %v759
  %v761 = vpop.f32.mrb[0].mxu0
  %762 = vmatprep.mubr.bf16.mxu0 0
  %763 = vmatmul.mubr.bf16.gmra.mrb[0].mxu0 %v319
  %v764 = vpop.f32.mrb[0].mxu0
  %v765 = vadd.f32 0.0, %v764
  %v766 = vpop.f32.mrb[0].mxu0
  %v767 = vpop.f32.mrb[0].mxu0
  %v768 = vadd.f32 0.0, %v767
  %v769 = vpop.f32.mrb[0].mxu0
  %770 = vmatprep.mubr.bf16.mxu0 0
  %771 = vmatmul.mubr.bf16.gmra.mrb[0].mxu0 %v320
  %v772 = vpop.f32.mrb[0].mxu0
  %v773 = vadd.f32 0.0, %v772
  %v774 = vpop.f32.mrb[0].mxu0
  %v775 = vpop.f32.mrb[0].mxu0
  %v776 = vadd.f32 0.0, %v775
  %v777 = vpop.f32.mrb[0].mxu0
  %778 = vmatprep.mubr.bf16.mxu0 0
  %779 = vmatmul.mubr.bf16.gmra.mrb[0].mxu0 %v321
  %v780 = vpop.f32.mrb[0].mxu0
  %v781 = vadd.f32 0.0, %v780
  %v782 = vpop.f32.mrb[0].mxu0
  %v783 = vpop.f32.mrb[0].mxu0
  %v784 = vadd.f32 0.0, %v783
  %v785 = vpop.f32.mrb[0].mxu0
  %786 = vmatprep.mubr.bf16.mxu0 0
  %787 = vmatmul.mubr.bf16.gmra.mrb[0].mxu0 %v322
  %v788 = vpop.f32.mrb[0].mxu0
  %v789 = vadd.f32 0.0, %v788
  %v790 = vpop.f32.mrb[0].mxu0
  %v791 = vpop.f32.mrb[0].mxu0
  %v792 = vadd.f32 0.0, %v791
  %v793 = vpop.f32.mrb[0].mxu0
  %794 = vmatprep.mubr.bf16.mxu0 0
  %795 = vmatmul.mubr.bf16.gmra.mrb[0].mxu0 %v323
  %v796 = vpop.f32.mrb[0].mxu0
  %v797 = vadd.f32 0.0, %v796
  %v798 = vpop.f32.mrb[0].mxu0
  %v799 = vpop.f32.mrb[0].mxu0
  %v800 = vadd.f32 0.0, %v799
  %v801 = vpop.f32.mrb[0].mxu0
  %802 = vmatprep.mubr.bf16.mxu0 0
  %803 = vmatmul.mubr.bf16.gmra.mrb[0].mxu0 %v324
  %v804 = vpop.f32.mrb[0].mxu0
  %v805 = vadd.f32 0.0, %v804
  %v806 = vpop.f32.mrb[0].mxu0
  %v807 = vpop.f32.mrb[0].mxu0
  %v808 = vadd.f32 0.0, %v807
  %v809 = vpop.f32.mrb[0].mxu0
  %810 = vmatprep.mubr.bf16.mxu0 0
  %811 = vmatmul.mubr.bf16.gmra.mrb[0].mxu0 %v325
  %v812 = vpop.f32.mrb[0].mxu0
  %v813 = vadd.f32 0.0, %v812
  %v814 = vpop.f32.mrb[0].mxu0
  %v815 = vpop.f32.mrb[0].mxu0
  %v816 = vadd.f32 0.0, %v815
  %v817 = vpop.f32.mrb[0].mxu0
  %818 = vmatprep.mubr.bf16.mxu0 0
  %819 = vmatmul.mubr.bf16.gmra.mrb[0].mxu0 %v326
  %v820 = vpop.f32.mrb[0].mxu0
  %v821 = vadd.f32 0.0, %v820
  %v822 = vpop.f32.mrb[0].mxu0
  %v823 = vpop.f32.mrb[0].mxu0
  %v824 = vadd.f32 0.0, %v823
  %v825 = vpop.f32.mrb[0].mxu0
  %826 = vmatprep.mubr.bf16.mxu0 0
  %827 = vmatmul.mubr.bf16.gmra.mrb[0].mxu0 %v327
  %v828 = vpop.f32.mrb[0].mxu0
  %v829 = vadd.f32 0.0, %v828
  %v830 = vpop.f32.mrb[0].mxu0
  %v831 = vpop.f32.mrb[0].mxu0
  %v832 = vadd.f32 0.0, %v831
  %v833 = vpop.f32.mrb[0].mxu0
  %834 = vmatprep.mubr.bf16.mxu0 0
  %835 = vmatmul.mubr.bf16.gmra.mrb[0].mxu0 %v328
  %v836 = vpop.f32.mrb[0].mxu0
  %v837 = vadd.f32 0.0, %v836
  %v838 = vpop.f32.mrb[0].mxu0
  %v839 = vpop.f32.mrb[0].mxu0
  %v840 = vadd.f32 0.0, %v839
  %v841 = vpop.f32.mrb[0].mxu0
  %842 = vdwg.mxu0
  %v843 = vpack.c.bf16 %v528, %v524
  %v844 = vpack.c.bf16 %v530, %v526
  %v845 = vpack.c.bf16 %v720, %v717
  %v846 = vpack.c.bf16 %v538, %v534
  %v847 = vpack.c.bf16 %v540, %v536
  %v848 = vpack.c.bf16 %v728, %v725
  %v849 = vpack.c.bf16 %v548, %v544
  %v850 = vpack.c.bf16 %v550, %v546
  %v851 = vpack.c.bf16 %v736, %v733
  %v852 = vpack.c.bf16 %v558, %v554
  %v853 = vpack.c.bf16 %v560, %v556
  %v854 = vpack.c.bf16 %v744, %v741
  %v855 = vpack.c.bf16 %v568, %v564
  %v856 = vpack.c.bf16 %v570, %v566
  %v857 = vpack.c.bf16 %v752, %v749
  %v858 = vpack.c.bf16 %v578, %v574
  %v859 = vpack.c.bf16 %v580, %v576
  %v860 = vpack.c.bf16 %v760, %v757
  %v861 = vpack.c.bf16 %v588, %v584
  %v862 = vpack.c.bf16 %v590, %v586
  %v863 = vpack.c.bf16 %v768, %v765
  %v864 = vpack.c.bf16 %v598, %v594
  %v865 = vpack.c.bf16 %v600, %v596
  %v866 = vpack.c.bf16 %v776, %v773
  %v867 = vpack.c.bf16 %v608, %v604
  %v868 = vpack.c.bf16 %v610, %v606
  %v869 = vpack.c.bf16 %v784, %v781
  %v870 = vpack.c.bf16 %v618, %v614
  %v871 = vpack.c.bf16 %v620, %v616
  %v872 = vpack.c.bf16 %v792, %v789
  %v873 = vpack.c.bf16 %v628, %v624
  %v874 = vpack.c.bf16 %v630, %v626
  %v875 = vpack.c.bf16 %v800, %v797
  %v876 = vpack.c.bf16 %v638, %v634
  %v877 = vpack.c.bf16 %v640, %v636
  %v878 = vpack.c.bf16 %v808, %v805
  %v879 = vpack.c.bf16 %v648, %v644
  %v880 = vpack.c.bf16 %v650, %v646
  %v881 = vpack.c.bf16 %v816, %v813
  %v882 = vpack.c.bf16 %v658, %v654
  %v883 = vpack.c.bf16 %v660, %v656
  %v884 = vpack.c.bf16 %v824, %v821
  %v885 = vpack.c.bf16 %v668, %v664
  %v886 = vpack.c.bf16 %v670, %v666
  %v887 = vpack.c.bf16 %v832, %v829
  %v888 = vpack.c.bf16 %v678, %v674
  %v889 = vpack.c.bf16 %v680, %v676
  %v890 = vpack.c.bf16 %v840, %v837
  %v891 = vmax.bf16 %v843, 0
  %v892 = vmax.bf16 %v844, 0
  %v893 = vmax.bf16 %v845, 0
  %v894 = vmax.bf16 %v846, 0
  %v895 = vmax.bf16 %v847, 0
  %v896 = vmax.bf16 %v848, 0
  %v897 = vmax.bf16 %v849, 0
  %v898 = vmax.bf16 %v850, 0
  %v899 = vmax.bf16 %v851, 0
  %v900 = vmax.bf16 %v852, 0
  %v901 = vmax.bf16 %v853, 0
  %v902 = vmax.bf16 %v854, 0
  %v903 = vmax.bf16 %v855, 0
  %v904 = vmax.bf16 %v856, 0
  %v905 = vmax.bf16 %v857, 0
  %v906 = vmax.bf16 %v858, 0
  %v907 = vmax.bf16 %v859, 0
  %v908 = vmax.bf16 %v860, 0
  %v909 = vmax.bf16 %v861, 0
  %v910 = vmax.bf16 %v862, 0
  %v911 = vmax.bf16 %v863, 0
  %v912 = vmax.bf16 %v864, 0
  %v913 = vmax.bf16 %v865, 0
  %v914 = vmax.bf16 %v866, 0
  %v915 = vmax.bf16 %v867, 0
  %v916 = vmax.bf16 %v868, 0
  %v917 = vmax.bf16 %v869, 0
  %v918 = vmax.bf16 %v870, 0
  %v919 = vmax.bf16 %v871, 0
  %v920 = vmax.bf16 %v872, 0
  %v921 = vmax.bf16 %v873, 0
  %v922 = vmax.bf16 %v874, 0
  %v923 = vmax.bf16 %v875, 0
  %v924 = vmax.bf16 %v876, 0
  %v925 = vmax.bf16 %v877, 0
  %v926 = vmax.bf16 %v878, 0
  %v927 = vmax.bf16 %v879, 0
  %v928 = vmax.bf16 %v880, 0
  %v929 = vmax.bf16 %v881, 0
  %v930 = vmax.bf16 %v882, 0
  %v931 = vmax.bf16 %v883, 0
  %v932 = vmax.bf16 %v884, 0
  %v933 = vmax.bf16 %v885, 0
  %v934 = vmax.bf16 %v886, 0
  %v935 = vmax.bf16 %v887, 0
  %v936 = vmax.bf16 %v888, 0
  %v937 = vmax.bf16 %v889, 0
  %v938 = vmax.bf16 %v890, 0
  %v939 = vld [vmem:[%s4] sm:$0xff]
  %v940 = vld [vmem:[%s4 + $0x8] sm:$0xf]
  %v941 = vld [vmem:[%s4 + $0xc] sm:$0xff]
  %v942 = vld [vmem:[%s4 + $0x14] sm:$0xf]
  %v943 = vld [vmem:[%s4 + $0x18] sm:$0xff]
  %v944 = vld [vmem:[%s4 + $0x20] sm:$0xf]
  %v945 = vld [vmem:[%s4 + $0x24] sm:$0xff]
  %v946 = vld [vmem:[%s4 + $0x2c] sm:$0xf]
  %v947 = vld [vmem:[%s4 + $0x30] sm:$0xff]
  %v948 = vld [vmem:[%s4 + $0x38] sm:$0xf]
  %v949 = vld [vmem:[%s4 + $0x3c] sm:$0xff]
  %v950 = vld [vmem:[%s4 + $0x44] sm:$0xf]
  %v951 = vld [vmem:[%s4 + $0x48] sm:$0xff]
  %v952 = vld [vmem:[%s4 + $0x50] sm:$0xf]
  %v953 = vld [vmem:[%s4 + $0x54] sm:$0xff]
  %v954 = vld [vmem:[%s4 + $0x5c] sm:$0xf]
  %v955 = vld [vmem:[%s4 + $0x60] sm:$0xff]
  %v956 = vld [vmem:[%s4 + $0x68] sm:$0xf]
  %v957 = vld [vmem:[%s4 + $0x6c] sm:$0xff]
  %v958 = vld [vmem:[%s4 + $0x74] sm:$0xf]
  %v959 = vld [vmem:[%s4 + $0x78] sm:$0xff]
  %v960 = vld [vmem:[%s4 + $0x80] sm:$0xf]
  %v961 = vld [vmem:[%s4 + $0x84] sm:$0xff]
  %v962 = vld [vmem:[%s4 + $0x8c] sm:$0xf]
  %v963 = vld [vmem:[%s4 + $0x90] sm:$0xff]
  %v964 = vld [vmem:[%s4 + $0x98] sm:$0xf]
  %v965 = vld [vmem:[%s4 + $0x9c] sm:$0xff]
  %v966 = vld [vmem:[%s4 + $0xa4] sm:$0xf]
  %v967 = vld [vmem:[%s4 + $0xa8] sm:$0xff]
  %v968 = vld [vmem:[%s4 + $0xb0] sm:$0xf]
  %v969 = vld [vmem:[%s4 + $0xb4] sm:$0xff]
  %v970 = vld [vmem:[%s4 + $0xbc] sm:$0xf]
  %v971 = vld [vmem:[%s4 + $0xc0] sm:$0xff]
  %v972 = vld [vmem:[%s4 + $0xc8] sm:$0xf]
  %v973 = vld [vmem:[%s4 + $0xcc] sm:$0xff]
  %v974 = vld [vmem:[%s4 + $0xd4] sm:$0xf]
  %v975 = vld [vmem:[%s4 + $0xd8] sm:$0xff]
  %v976 = vld [vmem:[%s4 + $0xe0] sm:$0xf]
  %v977 = vld [vmem:[%s4 + $0xe4] sm:$0xff]
  %v978 = vld [vmem:[%s4 + $0xec] sm:$0xf]
  %v979 = vld [vmem:[%s4 + $0xf0] sm:$0xff]
  %v980 = vld [vmem:[%s4 + $0xf8] sm:$0xf]
  %v981 = vld [vmem:[%s4 + $0xfc] sm:$0xff]
  %v982 = vld [vmem:[%s4 + $0x104] sm:$0xf]
  %v983 = vld [vmem:[%s4 + $0x108] sm:$0xff]
  %v984 = vld [vmem:[%s4 + $0x110] sm:$0xf]
  %v985 = vld [vmem:[%s4 + $0x114] sm:$0xff]
  %v986 = vld [vmem:[%s4 + $0x11c] sm:$0xf]
  %v987 = vld [vmem:[%s4 + $0x120] sm:$0xff]
  %v988 = vld [vmem:[%s4 + $0x128] sm:$0xf]
  %v989 = vld [vmem:[%s4 + $0x12c] sm:$0xff]
  %v990 = vld [vmem:[%s4 + $0x134] sm:$0xf]
  %v991 = vld [vmem:[%s4 + $0x138] sm:$0xff]
  %v992 = vld [vmem:[%s4 + $0x140] sm:$0xf]
  %v993 = vld [vmem:[%s4 + $0x144] sm:$0xff]
  %v994 = vld [vmem:[%s4 + $0x14c] sm:$0xf]
  %v995 = vld [vmem:[%s4 + $0x150] sm:$0xff]
  %v996 = vld [vmem:[%s4 + $0x158] sm:$0xf]
  %v997 = vld [vmem:[%s4 + $0x15c] sm:$0xff]
  %v998 = vld [vmem:[%s4 + $0x164] sm:$0xf]
  %v999 = vld [vmem:[%s4 + $0x168] sm:$0xff]
  %v1000 = vld [vmem:[%s4 + $0x170] sm:$0xf]
  %v1001 = vld [vmem:[%s4 + $0x174] sm:$0xff]
  %v1002 = vld [vmem:[%s4 + $0x17c] sm:$0xf]
  %v1003 = vld [vmem:[%s4 + $0x180] sm:$0xff]
  %v1004 = vld [vmem:[%s4 + $0x188] sm:$0xf]
  %v1005 = vld [vmem:[%s4 + $0x18c] sm:$0xff]
  %v1006 = vld [vmem:[%s4 + $0x194] sm:$0xf]
  %v1007 = vld [vmem:[%s4 + $0x198] sm:$0xff]
  %v1008 = vld [vmem:[%s4 + $0x1a0] sm:$0xf]
  %v1009 = vld [vmem:[%s4 + $0x1a4] sm:$0xff]
  %v1010 = vld [vmem:[%s4 + $0x1ac] sm:$0xf]
  %v1011 = vld [vmem:[%s4 + $0x1b0] sm:$0xff]
  %v1012 = vld [vmem:[%s4 + $0x1b8] sm:$0xf]
  %v1013 = vld [vmem:[%s4 + $0x1bc] sm:$0xff]
  %v1014 = vld [vmem:[%s4 + $0x1c4] sm:$0xf]
  %v1015 = vld [vmem:[%s4 + $0x1c8] sm:$0xff]
  %v1016 = vld [vmem:[%s4 + $0x1d0] sm:$0xf]
  %v1017 = vld [vmem:[%s4 + $0x1d4] sm:$0xff]
  %v1018 = vld [vmem:[%s4 + $0x1dc] sm:$0xf]
  %v1019 = vld [vmem:[%s4 + $0x1e0] sm:$0xff]
  %v1020 = vld [vmem:[%s4 + $0x1e8] sm:$0xf]
  %v1021 = vld [vmem:[%s4 + $0x1ec] sm:$0xff]
  %v1022 = vld [vmem:[%s4 + $0x1f4] sm:$0xf]
  %v1023 = vld [vmem:[%s4 + $0x1f8] sm:$0xff]
  %v1024 = vld [vmem:[%s4 + $0x200] sm:$0xf]
  %v1025 = vld [vmem:[%s4 + $0x204] sm:$0xff]
  %v1026 = vld [vmem:[%s4 + $0x20c] sm:$0xf]
  %v1027 = vld [vmem:[%s4 + $0x210] sm:$0xff]
  %v1028 = vld [vmem:[%s4 + $0x218] sm:$0xf]
  %v1029 = vld [vmem:[%s4 + $0x21c] sm:$0xff]
  %v1030 = vld [vmem:[%s4 + $0x224] sm:$0xf]
  %v1031 = vld [vmem:[%s4 + $0x228] sm:$0xff]
  %v1032 = vld [vmem:[%s4 + $0x230] sm:$0xf]
  %v1033 = vld [vmem:[%s4 + $0x234] sm:$0xff]
  %v1034 = vld [vmem:[%s4 + $0x23c] sm:$0xf]
  %v1131 = vunpack.c.l.b16 %v939
  %v1132 = vunpack.c.h.b16 %v939
  %v1133 = vunpack.c.l.b16 %v940
  %v1134 = vunpack.c.l.b16 %v941
  %v1135 = vunpack.c.h.b16 %v941
  %v1136 = vunpack.c.l.b16 %v942
  %v1137 = vunpack.c.l.b16 %v943
  %v1138 = vunpack.c.h.b16 %v943
  %v1139 = vunpack.c.l.b16 %v944
  %v1140 = vunpack.c.l.b16 %v945
  %v1141 = vunpack.c.h.b16 %v945
  %v1142 = vunpack.c.l.b16 %v946
  %v1143 = vunpack.c.l.b16 %v947
  %v1144 = vunpack.c.h.b16 %v947
  %v1145 = vunpack.c.l.b16 %v948
  %v1146 = vunpack.c.l.b16 %v949
  %v1147 = vunpack.c.h.b16 %v949
  %v1148 = vunpack.c.l.b16 %v950
  %v1149 = vunpack.c.l.b16 %v951
  %v1150 = vunpack.c.h.b16 %v951
  %v1151 = vunpack.c.l.b16 %v952
  %v1152 = vunpack.c.l.b16 %v953
  %v1153 = vunpack.c.h.b16 %v953
  %v1154 = vunpack.c.l.b16 %v954
  %v1155 = vunpack.c.l.b16 %v955
  %v1156 = vunpack.c.h.b16 %v955
  %v1157 = vunpack.c.l.b16 %v956
  %v1158 = vunpack.c.l.b16 %v957
  %v1159 = vunpack.c.h.b16 %v957
  %v1160 = vunpack.c.l.b16 %v958
  %v1161 = vunpack.c.l.b16 %v959
  %v1162 = vunpack.c.h.b16 %v959
  %v1163 = vunpack.c.l.b16 %v960
  %v1164 = vunpack.c.l.b16 %v961
  %v1165 = vunpack.c.h.b16 %v961
  %v1166 = vunpack.c.l.b16 %v962
  %v1167 = vunpack.c.l.b16 %v963
  %v1168 = vunpack.c.h.b16 %v963
  %v1169 = vunpack.c.l.b16 %v964
  %v1170 = vunpack.c.l.b16 %v965
  %v1171 = vunpack.c.h.b16 %v965
  %v1172 = vunpack.c.l.b16 %v966
  %v1173 = vunpack.c.l.b16 %v967
  %v1174 = vunpack.c.h.b16 %v967
  %v1175 = vunpack.c.l.b16 %v968
  %v1176 = vunpack.c.l.b16 %v969
  %v1177 = vunpack.c.h.b16 %v969
  %v1178 = vunpack.c.l.b16 %v970
  %v1179 = vunpack.c.l.b16 %v971
  %v1180 = vunpack.c.h.b16 %v971
  %v1181 = vunpack.c.l.b16 %v972
  %v1182 = vunpack.c.l.b16 %v973
  %v1183 = vunpack.c.h.b16 %v973
  %v1184 = vunpack.c.l.b16 %v974
  %v1185 = vunpack.c.l.b16 %v975
  %v1186 = vunpack.c.h.b16 %v975
  %v1187 = vunpack.c.l.b16 %v976
  %v1188 = vunpack.c.l.b16 %v977
  %v1189 = vunpack.c.h.b16 %v977
  %v1190 = vunpack.c.l.b16 %v978
  %v1191 = vunpack.c.l.b16 %v979
  %v1192 = vunpack.c.h.b16 %v979
  %v1193 = vunpack.c.l.b16 %v980
  %v1194 = vunpack.c.l.b16 %v981
  %v1195 = vunpack.c.h.b16 %v981
  %v1196 = vunpack.c.l.b16 %v982
  %v1197 = vunpack.c.l.b16 %v983
  %v1198 = vunpack.c.h.b16 %v983
  %v1199 = vunpack.c.l.b16 %v984
  %v1200 = vunpack.c.l.b16 %v985
  %v1201 = vunpack.c.h.b16 %v985
  %v1202 = vunpack.c.l.b16 %v986
  %v1203 = vunpack.c.l.b16 %v987
  %v1204 = vunpack.c.h.b16 %v987
  %v1205 = vunpack.c.l.b16 %v988
  %v1206 = vunpack.c.l.b16 %v989
  %v1207 = vunpack.c.h.b16 %v989
  %v1208 = vunpack.c.l.b16 %v990
  %v1209 = vunpack.c.l.b16 %v991
  %v1210 = vunpack.c.h.b16 %v991
  %v1211 = vunpack.c.l.b16 %v992
  %v1212 = vunpack.c.l.b16 %v993
  %v1213 = vunpack.c.h.b16 %v993
  %v1214 = vunpack.c.l.b16 %v994
  %v1215 = vunpack.c.l.b16 %v995
  %v1216 = vunpack.c.h.b16 %v995
  %v1217 = vunpack.c.l.b16 %v996
  %v1218 = vunpack.c.l.b16 %v997
  %v1219 = vunpack.c.h.b16 %v997
  %v1220 = vunpack.c.l.b16 %v998
  %v1221 = vunpack.c.l.b16 %v999
  %v1222 = vunpack.c.h.b16 %v999
  %v1223 = vunpack.c.l.b16 %v1000
  %v1224 = vunpack.c.l.b16 %v1001
  %v1225 = vunpack.c.h.b16 %v1001
  %v1226 = vunpack.c.l.b16 %v1002
  %v1227 = vunpack.c.l.b16 %v1003
  %v1228 = vunpack.c.h.b16 %v1003
  %v1229 = vunpack.c.l.b16 %v1004
  %v1230 = vunpack.c.l.b16 %v1005
  %v1231 = vunpack.c.h.b16 %v1005
  %v1232 = vunpack.c.l.b16 %v1006
  %v1233 = vunpack.c.l.b16 %v1007
  %v1234 = vunpack.c.h.b16 %v1007
  %v1235 = vunpack.c.l.b16 %v1008
  %v1236 = vunpack.c.l.b16 %v1009
  %v1237 = vunpack.c.h.b16 %v1009
  %v1238 = vunpack.c.l.b16 %v1010
  %v1239 = vunpack.c.l.b16 %v1011
  %v1240 = vunpack.c.h.b16 %v1011
  %v1241 = vunpack.c.l.b16 %v1012
  %v1242 = vunpack.c.l.b16 %v1013
  %v1243 = vunpack.c.h.b16 %v1013
  %v1244 = vunpack.c.l.b16 %v1014
  %v1245 = vunpack.c.l.b16 %v1015
  %v1246 = vunpack.c.h.b16 %v1015
  %v1247 = vunpack.c.l.b16 %v1016
  %v1248 = vunpack.c.l.b16 %v1017
  %v1249 = vunpack.c.h.b16 %v1017
  %v1250 = vunpack.c.l.b16 %v1018
  %v1251 = vunpack.c.l.b16 %v1019
  %v1252 = vunpack.c.h.b16 %v1019
  %v1253 = vunpack.c.l.b16 %v1020
  %v1254 = vunpack.c.l.b16 %v1021
  %v1255 = vunpack.c.h.b16 %v1021
  %v1256 = vunpack.c.l.b16 %v1022
  %v1257 = vunpack.c.l.b16 %v1023
  %v1258 = vunpack.c.h.b16 %v1023
  %v1259 = vunpack.c.l.b16 %v1024
  %v1260 = vunpack.c.l.b16 %v1025
  %v1261 = vunpack.c.h.b16 %v1025
  %v1262 = vunpack.c.l.b16 %v1026
  %v1263 = vunpack.c.l.b16 %v1027
  %v1264 = vunpack.c.h.b16 %v1027
  %v1265 = vunpack.c.l.b16 %v1028
  %v1266 = vunpack.c.l.b16 %v1029
  %v1267 = vunpack.c.h.b16 %v1029
  %v1268 = vunpack.c.l.b16 %v1030
  %v1269 = vunpack.c.l.b16 %v1031
  %v1270 = vunpack.c.h.b16 %v1031
  %v1271 = vunpack.c.l.b16 %v1032
  %v1272 = vunpack.c.l.b16 %v1033
  %v1273 = vunpack.c.h.b16 %v1033
  %v1274 = vunpack.c.l.b16 %v1034
  %v1275 = vpack.c.b16 %v1134, %v1131
  %v1276 = vpack.c.b16 %v1135, %v1132
  %v1277 = vpack.c.b16 %v1136, %v1133
  %v1278 = vpack.c.b16 %v1140, %v1137
  %v1279 = vpack.c.b16 %v1141, %v1138
  %v1280 = vpack.c.b16 %v1142, %v1139
  %v1281 = vpack.c.b16 %v1146, %v1143
  %v1282 = vpack.c.b16 %v1147, %v1144
  %v1283 = vpack.c.b16 %v1148, %v1145
  %v1284 = vpack.c.b16 %v1152, %v1149
  %v1285 = vpack.c.b16 %v1153, %v1150
  %v1286 = vpack.c.b16 %v1154, %v1151
  %v1287 = vpack.c.b16 %v1158, %v1155
  %v1288 = vpack.c.b16 %v1159, %v1156
  %v1289 = vpack.c.b16 %v1160, %v1157
  %v1290 = vpack.c.b16 %v1164, %v1161
  %v1291 = vpack.c.b16 %v1165, %v1162
  %v1292 = vpack.c.b16 %v1166, %v1163
  %v1293 = vpack.c.b16 %v1170, %v1167
  %v1294 = vpack.c.b16 %v1171, %v1168
  %v1295 = vpack.c.b16 %v1172, %v1169
  %v1296 = vpack.c.b16 %v1176, %v1173
  %v1297 = vpack.c.b16 %v1177, %v1174
  %v1298 = vpack.c.b16 %v1178, %v1175
  %v1299 = vpack.c.b16 %v1182, %v1179
  %v1300 = vpack.c.b16 %v1183, %v1180
  %v1301 = vpack.c.b16 %v1184, %v1181
  %v1302 = vpack.c.b16 %v1188, %v1185
  %v1303 = vpack.c.b16 %v1189, %v1186
  %v1304 = vpack.c.b16 %v1190, %v1187
  %v1305 = vpack.c.b16 %v1194, %v1191
  %v1306 = vpack.c.b16 %v1195, %v1192
  %v1307 = vpack.c.b16 %v1196, %v1193
  %v1308 = vpack.c.b16 %v1200, %v1197
  %v1309 = vpack.c.b16 %v1201, %v1198
  %v1310 = vpack.c.b16 %v1202, %v1199
  %v1311 = vpack.c.b16 %v1206, %v1203
  %v1312 = vpack.c.b16 %v1207, %v1204
  %v1313 = vpack.c.b16 %v1208, %v1205
  %v1314 = vpack.c.b16 %v1212, %v1209
  %v1315 = vpack.c.b16 %v1213, %v1210
  %v1316 = vpack.c.b16 %v1214, %v1211
  %v1317 = vpack.c.b16 %v1218, %v1215
  %v1318 = vpack.c.b16 %v1219, %v1216
  %v1319 = vpack.c.b16 %v1220, %v1217
  %v1320 = vpack.c.b16 %v1224, %v1221
  %v1321 = vpack.c.b16 %v1225, %v1222
  %v1322 = vpack.c.b16 %v1226, %v1223
  %v1323 = vpack.c.b16 %v1230, %v1227
  %v1324 = vpack.c.b16 %v1231, %v1228
  %v1325 = vpack.c.b16 %v1232, %v1229
  %v1326 = vpack.c.b16 %v1236, %v1233
  %v1327 = vpack.c.b16 %v1237, %v1234
  %v1328 = vpack.c.b16 %v1238, %v1235
  %v1329 = vpack.c.b16 %v1242, %v1239
  %v1330 = vpack.c.b16 %v1243, %v1240
  %v1331 = vpack.c.b16 %v1244, %v1241
  %v1332 = vpack.c.b16 %v1248, %v1245
  %v1333 = vpack.c.b16 %v1249, %v1246
  %v1334 = vpack.c.b16 %v1250, %v1247
  %v1335 = vpack.c.b16 %v1254, %v1251
  %v1336 = vpack.c.b16 %v1255, %v1252
  %v1337 = vpack.c.b16 %v1256, %v1253
  %v1338 = vpack.c.b16 %v1260, %v1257
  %v1339 = vpack.c.b16 %v1261, %v1258
  %v1340 = vpack.c.b16 %v1262, %v1259
  %v1341 = vpack.c.b16 %v1266, %v1263
  %v1342 = vpack.c.b16 %v1267, %v1264
  %v1343 = vpack.c.b16 %v1268, %v1265
  %v1344 = vpack.c.b16 %v1272, %v1269
  %v1345 = vpack.c.b16 %v1273, %v1270
  %v1346 = vpack.c.b16 %v1274, %v1271
  %1419 = vmatprep.subr.bf16.mxu0 %v1276
  %1420 = vmatpush1.bf16.msra.mxu0 %v1275
  %1421 = vmatprep.subr.bf16.mxu0 %v1279
  %1422 = vmatpush1.bf16.msra.mxu0 %v1278
  %1423 = vmatprep.subr.bf16.mxu0 %v1282
  %1424 = vmatpush1.bf16.msra.mxu0 %v1281
  %1425 = vmatprep.subr.bf16.mxu0 %v1285
  %1426 = vmatpush1.bf16.msra.mxu0 %v1284
  %1427 = vmatprep.subr.bf16.mxu0 %v1288
  %1428 = vmatpush1.bf16.msra.mxu0 %v1287
  %1429 = vmatprep.subr.bf16.mxu0 %v1291
  %1430 = vmatpush1.bf16.msra.mxu0 %v1290
  %1431 = vmatprep.subr.bf16.mxu0 %v1294
  %1432 = vmatpush1.bf16.msra.mxu0 %v1293
  %1433 = vmatprep.subr.bf16.mxu0 %v1297
  %1434 = vmatpush1.bf16.msra.mxu0 %v1296
  %1435 = vmatprep.subr.bf16.mxu0 %v1300
  %1436 = vmatpush1.bf16.msra.mxu0 %v1299
  %1437 = vmatprep.subr.bf16.mxu0 %v1303
  %1438 = vmatpush1.bf16.msra.mxu0 %v1302
  %1439 = vmatprep.subr.bf16.mxu0 %v1306
  %1440 = vmatpush1.bf16.msra.mxu0 %v1305
  %1441 = vmatprep.subr.bf16.mxu0 %v1309
  %1442 = vmatpush1.bf16.msra.mxu0 %v1308
  %1443 = vmatprep.subr.bf16.mxu0 %v1312
  %1444 = vmatpush1.bf16.msra.mxu0 %v1311
  %1445 = vmatprep.subr.bf16.mxu0 %v1315
  %1446 = vmatpush1.bf16.msra.mxu0 %v1314
  %1447 = vmatprep.subr.bf16.mxu0 %v1318
  %1448 = vmatpush1.bf16.msra.mxu0 %v1317
  %1449 = vmatprep.subr.bf16.mxu0 %v1321
  %1450 = vmatpush1.bf16.msra.mxu0 %v1320
  %1451 = vmatprep.mubr.bf16.mxu0 %v892
  %1452 = vmatmul.mubr.bf16.gmra.mrb[0].mxu0 %v891
  %v1453 = vpop.f32.mrb[0].mxu0
  %v1454 = vadd.f32 0.0, %v1453
  %v1455 = vpop.f32.mrb[0].mxu0
  %v1456 = vadd.f32 0.0, %v1455
  %v1457 = vpop.f32.mrb[0].mxu0
  %v1458 = vadd.f32 0.0, %v1457
  %v1459 = vpop.f32.mrb[0].mxu0
  %v1460 = vadd.f32 0.0, %v1459
  %1461 = vmatprep.mubr.bf16.mxu0 %v895
  %1462 = vmatmul.mubr.bf16.gmra.mrb[0].mxu0 %v894
  %v1463 = vpop.f32.mrb[0].mxu0
  %v1464 = vadd.f32 0.0, %v1463
  %v1465 = vpop.f32.mrb[0].mxu0
  %v1466 = vadd.f32 0.0, %v1465
  %v1467 = vpop.f32.mrb[0].mxu0
  %v1468 = vadd.f32 0.0, %v1467
  %v1469 = vpop.f32.mrb[0].mxu0
  %v1470 = vadd.f32 0.0, %v1469
  %1471 = vmatprep.mubr.bf16.mxu0 %v898
  %1472 = vmatmul.mubr.bf16.gmra.mrb[0].mxu0 %v897
  %v1473 = vpop.f32.mrb[0].mxu0
  %v1474 = vadd.f32 0.0, %v1473
  %v1475 = vpop.f32.mrb[0].mxu0
  %v1476 = vadd.f32 0.0, %v1475
  %v1477 = vpop.f32.mrb[0].mxu0
  %v1478 = vadd.f32 0.0, %v1477
  %v1479 = vpop.f32.mrb[0].mxu0
  %v1480 = vadd.f32 0.0, %v1479
  %1481 = vmatprep.mubr.bf16.mxu0 %v901
  %1482 = vmatmul.mubr.bf16.gmra.mrb[0].mxu0 %v900
  %v1483 = vpop.f32.mrb[0].mxu0
  %v1484 = vadd.f32 0.0, %v1483
  %v1485 = vpop.f32.mrb[0].mxu0
  %v1486 = vadd.f32 0.0, %v1485
  %v1487 = vpop.f32.mrb[0].mxu0
  %v1488 = vadd.f32 0.0, %v1487
  %v1489 = vpop.f32.mrb[0].mxu0
  %v1490 = vadd.f32 0.0, %v1489
  %1491 = vmatprep.mubr.bf16.mxu0 %v904
  %1492 = vmatmul.mubr.bf16.gmra.mrb[0].mxu0 %v903
  %v1493 = vpop.f32.mrb[0].mxu0
  %v1494 = vadd.f32 0.0, %v1493
  %v1495 = vpop.f32.mrb[0].mxu0
  %v1496 = vadd.f32 0.0, %v1495
  %v1497 = vpop.f32.mrb[0].mxu0
  %v1498 = vadd.f32 0.0, %v1497
  %v1499 = vpop.f32.mrb[0].mxu0
  %v1500 = vadd.f32 0.0, %v1499
  %1501 = vmatprep.mubr.bf16.mxu0 %v907
  %1502 = vmatmul.mubr.bf16.gmra.mrb[0].mxu0 %v906
  %v1503 = vpop.f32.mrb[0].mxu0
  %v1504 = vadd.f32 0.0, %v1503
  %v1505 = vpop.f32.mrb[0].mxu0
  %v1506 = vadd.f32 0.0, %v1505
  %v1507 = vpop.f32.mrb[0].mxu0
  %v1508 = vadd.f32 0.0, %v1507
  %v1509 = vpop.f32.mrb[0].mxu0
  %v1510 = vadd.f32 0.0, %v1509
  %1511 = vmatprep.mubr.bf16.mxu0 %v910
  %1512 = vmatmul.mubr.bf16.gmra.mrb[0].mxu0 %v909
  %v1513 = vpop.f32.mrb[0].mxu0
  %v1514 = vadd.f32 0.0, %v1513
  %v1515 = vpop.f32.mrb[0].mxu0
  %v1516 = vadd.f32 0.0, %v1515
  %v1517 = vpop.f32.mrb[0].mxu0
  %v1518 = vadd.f32 0.0, %v1517
  %v1519 = vpop.f32.mrb[0].mxu0
  %v1520 = vadd.f32 0.0, %v1519
  %1521 = vmatprep.mubr.bf16.mxu0 %v913
  %1522 = vmatmul.mubr.bf16.gmra.mrb[0].mxu0 %v912
  %v1523 = vpop.f32.mrb[0].mxu0
  %v1524 = vadd.f32 0.0, %v1523
  %v1525 = vpop.f32.mrb[0].mxu0
  %v1526 = vadd.f32 0.0, %v1525
  %v1527 = vpop.f32.mrb[0].mxu0
  %v1528 = vadd.f32 0.0, %v1527
  %v1529 = vpop.f32.mrb[0].mxu0
  %v1530 = vadd.f32 0.0, %v1529
  %1531 = vmatprep.mubr.bf16.mxu0 %v916
  %1532 = vmatmul.mubr.bf16.gmra.mrb[0].mxu0 %v915
  %v1533 = vpop.f32.mrb[0].mxu0
  %v1534 = vadd.f32 0.0, %v1533
  %v1535 = vpop.f32.mrb[0].mxu0
  %v1536 = vadd.f32 0.0, %v1535
  %v1537 = vpop.f32.mrb[0].mxu0
  %v1538 = vadd.f32 0.0, %v1537
  %v1539 = vpop.f32.mrb[0].mxu0
  %v1540 = vadd.f32 0.0, %v1539
  %1541 = vmatprep.mubr.bf16.mxu0 %v919
  %1542 = vmatmul.mubr.bf16.gmra.mrb[0].mxu0 %v918
  %v1543 = vpop.f32.mrb[0].mxu0
  %v1544 = vadd.f32 0.0, %v1543
  %v1545 = vpop.f32.mrb[0].mxu0
  %v1546 = vadd.f32 0.0, %v1545
  %v1547 = vpop.f32.mrb[0].mxu0
  %v1548 = vadd.f32 0.0, %v1547
  %v1549 = vpop.f32.mrb[0].mxu0
  %v1550 = vadd.f32 0.0, %v1549
  %1551 = vmatprep.mubr.bf16.mxu0 %v922
  %1552 = vmatmul.mubr.bf16.gmra.mrb[0].mxu0 %v921
  %v1553 = vpop.f32.mrb[0].mxu0
  %v1554 = vadd.f32 0.0, %v1553
  %v1555 = vpop.f32.mrb[0].mxu0
  %v1556 = vadd.f32 0.0, %v1555
  %v1557 = vpop.f32.mrb[0].mxu0
  %v1558 = vadd.f32 0.0, %v1557
  %v1559 = vpop.f32.mrb[0].mxu0
  %v1560 = vadd.f32 0.0, %v1559
  %1561 = vmatprep.mubr.bf16.mxu0 %v925
  %1562 = vmatmul.mubr.bf16.gmra.mrb[0].mxu0 %v924
  %v1563 = vpop.f32.mrb[0].mxu0
  %v1564 = vadd.f32 0.0, %v1563
  %v1565 = vpop.f32.mrb[0].mxu0
  %v1566 = vadd.f32 0.0, %v1565
  %v1567 = vpop.f32.mrb[0].mxu0
  %v1568 = vadd.f32 0.0, %v1567
  %v1569 = vpop.f32.mrb[0].mxu0
  %v1570 = vadd.f32 0.0, %v1569
  %1571 = vmatprep.mubr.bf16.mxu0 %v928
  %1572 = vmatmul.mubr.bf16.gmra.mrb[0].mxu0 %v927
  %v1573 = vpop.f32.mrb[0].mxu0
  %v1574 = vadd.f32 0.0, %v1573
  %v1575 = vpop.f32.mrb[0].mxu0
  %v1576 = vadd.f32 0.0, %v1575
  %v1577 = vpop.f32.mrb[0].mxu0
  %v1578 = vadd.f32 0.0, %v1577
  %v1579 = vpop.f32.mrb[0].mxu0
  %v1580 = vadd.f32 0.0, %v1579
  %1581 = vmatprep.mubr.bf16.mxu0 %v931
  %1582 = vmatmul.mubr.bf16.gmra.mrb[0].mxu0 %v930
  %v1583 = vpop.f32.mrb[0].mxu0
  %v1584 = vadd.f32 0.0, %v1583
  %v1585 = vpop.f32.mrb[0].mxu0
  %v1586 = vadd.f32 0.0, %v1585
  %v1587 = vpop.f32.mrb[0].mxu0
  %v1588 = vadd.f32 0.0, %v1587
  %v1589 = vpop.f32.mrb[0].mxu0
  %v1590 = vadd.f32 0.0, %v1589
  %1591 = vmatprep.mubr.bf16.mxu0 %v934
  %1592 = vmatmul.mubr.bf16.gmra.mrb[0].mxu0 %v933
  %v1593 = vpop.f32.mrb[0].mxu0
  %v1594 = vadd.f32 0.0, %v1593
  %v1595 = vpop.f32.mrb[0].mxu0
  %v1596 = vadd.f32 0.0, %v1595
  %v1597 = vpop.f32.mrb[0].mxu0
  %v1598 = vadd.f32 0.0, %v1597
  %v1599 = vpop.f32.mrb[0].mxu0
  %v1600 = vadd.f32 0.0, %v1599
  %1601 = vmatprep.mubr.bf16.mxu0 %v937
  %1602 = vmatmul.mubr.bf16.gmra.mrb[0].mxu0 %v936
  %v1603 = vpop.f32.mrb[0].mxu0
  %v1604 = vadd.f32 0.0, %v1603
  %v1605 = vpop.f32.mrb[0].mxu0
  %v1606 = vadd.f32 0.0, %v1605
  %v1607 = vpop.f32.mrb[0].mxu0
  %v1608 = vadd.f32 0.0, %v1607
  %v1609 = vpop.f32.mrb[0].mxu0
  %v1610 = vadd.f32 0.0, %v1609
  %1611 = vdwg.mxu0
  %1612 = vmatprep.subr.bf16.mxu0 %v1324
  %1613 = vmatpush1.bf16.msra.mxu0 %v1323
  %1614 = vmatprep.subr.bf16.mxu0 %v1327
  %1615 = vmatpush1.bf16.msra.mxu0 %v1326
  %1616 = vmatprep.subr.bf16.mxu0 %v1330
  %1617 = vmatpush1.bf16.msra.mxu0 %v1329
  %1618 = vmatprep.subr.bf16.mxu0 %v1333
  %1619 = vmatpush1.bf16.msra.mxu0 %v1332
  %1620 = vmatprep.subr.bf16.mxu0 %v1336
  %1621 = vmatpush1.bf16.msra.mxu0 %v1335
  %1622 = vmatprep.subr.bf16.mxu0 %v1339
  %1623 = vmatpush1.bf16.msra.mxu0 %v1338
  %1624 = vmatprep.subr.bf16.mxu0 %v1342
  %1625 = vmatpush1.bf16.msra.mxu0 %v1341
  %1626 = vmatprep.subr.bf16.mxu0 %v1345
  %1627 = vmatpush1.bf16.msra.mxu0 %v1344
  %1628 = vmatprep.subr.bf16.mxu0 0
  %1629 = vmatpush1.bf16.msra.mxu0 0
  %1630 = vmatprep.subr.bf16.mxu0 0
  %1631 = vmatpush1.bf16.msra.mxu0 0
  %1632 = vmatprep.subr.bf16.mxu0 0
  %1633 = vmatpush1.bf16.msra.mxu0 0
  %1634 = vmatprep.subr.bf16.mxu0 0
  %1635 = vmatpush1.bf16.msra.mxu0 0
  %1636 = vmatprep.subr.bf16.mxu0 0
  %1637 = vmatpush1.bf16.msra.mxu0 0
  %1638 = vmatprep.subr.bf16.mxu0 0
  %1639 = vmatpush1.bf16.msra.mxu0 0
  %1640 = vmatprep.subr.bf16.mxu0 0
  %1641 = vmatpush1.bf16.msra.mxu0 0
  %1642 = vmatprep.subr.bf16.mxu0 0
  %1643 = vmatpush1.bf16.msra.mxu0 0
  %1644 = vmatprep.mubr.bf16.mxu0 0
  %1645 = vmatmul.mubr.bf16.gmra.mrb[0].mxu0 %v893
  %v1646 = vpop.f32.mrb[0].mxu0
  %v1647 = vadd.f32 %v1454, %v1646
  %v1648 = vpop.f32.mrb[0].mxu0
  %v1649 = vadd.f32 %v1456, %v1648
  %v1650 = vpop.f32.mrb[0].mxu0
  %v1651 = vadd.f32 %v1458, %v1650
  %v1652 = vpop.f32.mrb[0].mxu0
  %v1653 = vadd.f32 %v1460, %v1652
  %1654 = vmatprep.mubr.bf16.mxu0 0
  %1655 = vmatmul.mubr.bf16.gmra.mrb[0].mxu0 %v896
  %v1656 = vpop.f32.mrb[0].mxu0
  %v1657 = vadd.f32 %v1464, %v1656
  %v1658 = vpop.f32.mrb[0].mxu0
  %v1659 = vadd.f32 %v1466, %v1658
  %v1660 = vpop.f32.mrb[0].mxu0
  %v1661 = vadd.f32 %v1468, %v1660
  %v1662 = vpop.f32.mrb[0].mxu0
  %v1663 = vadd.f32 %v1470, %v1662
  %1664 = vmatprep.mubr.bf16.mxu0 0
  %1665 = vmatmul.mubr.bf16.gmra.mrb[0].mxu0 %v899
  %v1666 = vpop.f32.mrb[0].mxu0
  %v1667 = vadd.f32 %v1474, %v1666
  %v1668 = vpop.f32.mrb[0].mxu0
  %v1669 = vadd.f32 %v1476, %v1668
  %v1670 = vpop.f32.mrb[0].mxu0
  %v1671 = vadd.f32 %v1478, %v1670
  %v1672 = vpop.f32.mrb[0].mxu0
  %v1673 = vadd.f32 %v1480, %v1672
  %1674 = vmatprep.mubr.bf16.mxu0 0
  %1675 = vmatmul.mubr.bf16.gmra.mrb[0].mxu0 %v902
  %v1676 = vpop.f32.mrb[0].mxu0
  %v1677 = vadd.f32 %v1484, %v1676
  %v1678 = vpop.f32.mrb[0].mxu0
  %v1679 = vadd.f32 %v1486, %v1678
  %v1680 = vpop.f32.mrb[0].mxu0
  %v1681 = vadd.f32 %v1488, %v1680
  %v1682 = vpop.f32.mrb[0].mxu0
  %v1683 = vadd.f32 %v1490, %v1682
  %1684 = vmatprep.mubr.bf16.mxu0 0
  %1685 = vmatmul.mubr.bf16.gmra.mrb[0].mxu0 %v905
  %v1686 = vpop.f32.mrb[0].mxu0
  %v1687 = vadd.f32 %v1494, %v1686
  %v1688 = vpop.f32.mrb[0].mxu0
  %v1689 = vadd.f32 %v1496, %v1688
  %v1690 = vpop.f32.mrb[0].mxu0
  %v1691 = vadd.f32 %v1498, %v1690
  %v1692 = vpop.f32.mrb[0].mxu0
  %v1693 = vadd.f32 %v1500, %v1692
  %1694 = vmatprep.mubr.bf16.mxu0 0
  %1695 = vmatmul.mubr.bf16.gmra.mrb[0].mxu0 %v908
  %v1696 = vpop.f32.mrb[0].mxu0
  %v1697 = vadd.f32 %v1504, %v1696
  %v1698 = vpop.f32.mrb[0].mxu0
  %v1699 = vadd.f32 %v1506, %v1698
  %v1700 = vpop.f32.mrb[0].mxu0
  %v1701 = vadd.f32 %v1508, %v1700
  %v1702 = vpop.f32.mrb[0].mxu0
  %v1703 = vadd.f32 %v1510, %v1702
  %1704 = vmatprep.mubr.bf16.mxu0 0
  %1705 = vmatmul.mubr.bf16.gmra.mrb[0].mxu0 %v911
  %v1706 = vpop.f32.mrb[0].mxu0
  %v1707 = vadd.f32 %v1514, %v1706
  %v1708 = vpop.f32.mrb[0].mxu0
  %v1709 = vadd.f32 %v1516, %v1708
  %v1710 = vpop.f32.mrb[0].mxu0
  %v1711 = vadd.f32 %v1518, %v1710
  %v1712 = vpop.f32.mrb[0].mxu0
  %v1713 = vadd.f32 %v1520, %v1712
  %1714 = vmatprep.mubr.bf16.mxu0 0
  %1715 = vmatmul.mubr.bf16.gmra.mrb[0].mxu0 %v914
  %v1716 = vpop.f32.mrb[0].mxu0
  %v1717 = vadd.f32 %v1524, %v1716
  %v1718 = vpop.f32.mrb[0].mxu0
  %v1719 = vadd.f32 %v1526, %v1718
  %v1720 = vpop.f32.mrb[0].mxu0
  %v1721 = vadd.f32 %v1528, %v1720
  %v1722 = vpop.f32.mrb[0].mxu0
  %v1723 = vadd.f32 %v1530, %v1722
  %1724 = vmatprep.mubr.bf16.mxu0 0
  %1725 = vmatmul.mubr.bf16.gmra.mrb[0].mxu0 %v917
  %v1726 = vpop.f32.mrb[0].mxu0
  %v1727 = vadd.f32 %v1534, %v1726
  %v1728 = vpop.f32.mrb[0].mxu0
  %v1729 = vadd.f32 %v1536, %v1728
  %v1730 = vpop.f32.mrb[0].mxu0
  %v1731 = vadd.f32 %v1538, %v1730
  %v1732 = vpop.f32.mrb[0].mxu0
  %v1733 = vadd.f32 %v1540, %v1732
  %1734 = vmatprep.mubr.bf16.mxu0 0
  %1735 = vmatmul.mubr.bf16.gmra.mrb[0].mxu0 %v920
  %v1736 = vpop.f32.mrb[0].mxu0
  %v1737 = vadd.f32 %v1544, %v1736
  %v1738 = vpop.f32.mrb[0].mxu0
  %v1739 = vadd.f32 %v1546, %v1738
  %v1740 = vpop.f32.mrb[0].mxu0
  %v1741 = vadd.f32 %v1548, %v1740
  %v1742 = vpop.f32.mrb[0].mxu0
  %v1743 = vadd.f32 %v1550, %v1742
  %1744 = vmatprep.mubr.bf16.mxu0 0
  %1745 = vmatmul.mubr.bf16.gmra.mrb[0].mxu0 %v923
  %v1746 = vpop.f32.mrb[0].mxu0
  %v1747 = vadd.f32 %v1554, %v1746
  %v1748 = vpop.f32.mrb[0].mxu0
  %v1749 = vadd.f32 %v1556, %v1748
  %v1750 = vpop.f32.mrb[0].mxu0
  %v1751 = vadd.f32 %v1558, %v1750
  %v1752 = vpop.f32.mrb[0].mxu0
  %v1753 = vadd.f32 %v1560, %v1752
  %1754 = vmatprep.mubr.bf16.mxu0 0
  %1755 = vmatmul.mubr.bf16.gmra.mrb[0].mxu0 %v926
  %v1756 = vpop.f32.mrb[0].mxu0
  %v1757 = vadd.f32 %v1564, %v1756
  %v1758 = vpop.f32.mrb[0].mxu0
  %v1759 = vadd.f32 %v1566, %v1758
  %v1760 = vpop.f32.mrb[0].mxu0
  %v1761 = vadd.f32 %v1568, %v1760
  %v1762 = vpop.f32.mrb[0].mxu0
  %v1763 = vadd.f32 %v1570, %v1762
  %1764 = vmatprep.mubr.bf16.mxu0 0
  %1765 = vmatmul.mubr.bf16.gmra.mrb[0].mxu0 %v929
  %v1766 = vpop.f32.mrb[0].mxu0
  %v1767 = vadd.f32 %v1574, %v1766
  %v1768 = vpop.f32.mrb[0].mxu0
  %v1769 = vadd.f32 %v1576, %v1768
  %v1770 = vpop.f32.mrb[0].mxu0
  %v1771 = vadd.f32 %v1578, %v1770
  %v1772 = vpop.f32.mrb[0].mxu0
  %v1773 = vadd.f32 %v1580, %v1772
  %1774 = vmatprep.mubr.bf16.mxu0 0
  %1775 = vmatmul.mubr.bf16.gmra.mrb[0].mxu0 %v932
  %v1776 = vpop.f32.mrb[0].mxu0
  %v1777 = vadd.f32 %v1584, %v1776
  %v1778 = vpop.f32.mrb[0].mxu0
  %v1779 = vadd.f32 %v1586, %v1778
  %v1780 = vpop.f32.mrb[0].mxu0
  %v1781 = vadd.f32 %v1588, %v1780
  %v1782 = vpop.f32.mrb[0].mxu0
  %v1783 = vadd.f32 %v1590, %v1782
  %1784 = vmatprep.mubr.bf16.mxu0 0
  %1785 = vmatmul.mubr.bf16.gmra.mrb[0].mxu0 %v935
  %v1786 = vpop.f32.mrb[0].mxu0
  %v1787 = vadd.f32 %v1594, %v1786
  %v1788 = vpop.f32.mrb[0].mxu0
  %v1789 = vadd.f32 %v1596, %v1788
  %v1790 = vpop.f32.mrb[0].mxu0
  %v1791 = vadd.f32 %v1598, %v1790
  %v1792 = vpop.f32.mrb[0].mxu0
  %v1793 = vadd.f32 %v1600, %v1792
  %1794 = vmatprep.mubr.bf16.mxu0 0
  %1795 = vmatmul.mubr.bf16.gmra.mrb[0].mxu0 %v938
  %v1796 = vpop.f32.mrb[0].mxu0
  %v1797 = vadd.f32 %v1604, %v1796
  %v1798 = vpop.f32.mrb[0].mxu0
  %v1799 = vadd.f32 %v1606, %v1798
  %v1800 = vpop.f32.mrb[0].mxu0
  %v1801 = vadd.f32 %v1608, %v1800
  %v1802 = vpop.f32.mrb[0].mxu0
  %v1803 = vadd.f32 %v1610, %v1802
  %1804 = vdwg.mxu0
  %1805 = vmatprep.subr.bf16.mxu0 0
  %1806 = vmatpush1.bf16.msra.mxu0 %v1277
  %1807 = vmatprep.subr.bf16.mxu0 0
  %1808 = vmatpush1.bf16.msra.mxu0 %v1280
  %1809 = vmatprep.subr.bf16.mxu0 0
  %1810 = vmatpush1.bf16.msra.mxu0 %v1283
  %1811 = vmatprep.subr.bf16.mxu0 0
  %1812 = vmatpush1.bf16.msra.mxu0 %v1286
  %1813 = vmatprep.subr.bf16.mxu0 0
  %1814 = vmatpush1.bf16.msra.mxu0 %v1289
  %1815 = vmatprep.subr.bf16.mxu0 0
  %1816 = vmatpush1.bf16.msra.mxu0 %v1292
  %1817 = vmatprep.subr.bf16.mxu0 0
  %1818 = vmatpush1.bf16.msra.mxu0 %v1295
  %1819 = vmatprep.subr.bf16.mxu0 0
  %1820 = vmatpush1.bf16.msra.mxu0 %v1298
  %1821 = vmatprep.subr.bf16.mxu0 0
  %1822 = vmatpush1.bf16.msra.mxu0 %v1301
  %1823 = vmatprep.subr.bf16.mxu0 0
  %1824 = vmatpush1.bf16.msra.mxu0 %v1304
  %1825 = vmatprep.subr.bf16.mxu0 0
  %1826 = vmatpush1.bf16.msra.mxu0 %v1307
  %1827 = vmatprep.subr.bf16.mxu0 0
  %1828 = vmatpush1.bf16.msra.mxu0 %v1310
  %1829 = vmatprep.subr.bf16.mxu0 0
  %1830 = vmatpush1.bf16.msra.mxu0 %v1313
  %1831 = vmatprep.subr.bf16.mxu0 0
  %1832 = vmatpush1.bf16.msra.mxu0 %v1316
  %1833 = vmatprep.subr.bf16.mxu0 0
  %1834 = vmatpush1.bf16.msra.mxu0 %v1319
  %1835 = vmatprep.subr.bf16.mxu0 0
  %1836 = vmatpush1.bf16.msra.mxu0 %v1322
  %1837 = vmatprep.mubr.bf16.mxu0 %v892
  %1838 = vmatmul.mubr.bf16.gmra.mrb[0].mxu0 %v891
  %v1839 = vpop.f32.mrb[0].mxu0
  %v1840 = vadd.f32 0.0, %v1839
  %v1841 = vpop.f32.mrb[0].mxu0
  %v1842 = vpop.f32.mrb[0].mxu0
  %v1843 = vadd.f32 0.0, %v1842
  %v1844 = vpop.f32.mrb[0].mxu0
  %1845 = vmatprep.mubr.bf16.mxu0 %v895
  %1846 = vmatmul.mubr.bf16.gmra.mrb[0].mxu0 %v894
  %v1847 = vpop.f32.mrb[0].mxu0
  %v1848 = vadd.f32 0.0, %v1847
  %v1849 = vpop.f32.mrb[0].mxu0
  %v1850 = vpop.f32.mrb[0].mxu0
  %v1851 = vadd.f32 0.0, %v1850
  %v1852 = vpop.f32.mrb[0].mxu0
  %1853 = vmatprep.mubr.bf16.mxu0 %v898
  %1854 = vmatmul.mubr.bf16.gmra.mrb[0].mxu0 %v897
  %v1855 = vpop.f32.mrb[0].mxu0
  %v1856 = vadd.f32 0.0, %v1855
  %v1857 = vpop.f32.mrb[0].mxu0
  %v1858 = vpop.f32.mrb[0].mxu0
  %v1859 = vadd.f32 0.0, %v1858
  %v1860 = vpop.f32.mrb[0].mxu0
  %1861 = vmatprep.mubr.bf16.mxu0 %v901
  %1862 = vmatmul.mubr.bf16.gmra.mrb[0].mxu0 %v900
  %v1863 = vpop.f32.mrb[0].mxu0
  %v1864 = vadd.f32 0.0, %v1863
  %v1865 = vpop.f32.mrb[0].mxu0
  %v1866 = vpop.f32.mrb[0].mxu0
  %v1867 = vadd.f32 0.0, %v1866
  %v1868 = vpop.f32.mrb[0].mxu0
  %1869 = vmatprep.mubr.bf16.mxu0 %v904
  %1870 = vmatmul.mubr.bf16.gmra.mrb[0].mxu0 %v903
  %v1871 = vpop.f32.mrb[0].mxu0
  %v1872 = vadd.f32 0.0, %v1871
  %v1873 = vpop.f32.mrb[0].mxu0
  %v1874 = vpop.f32.mrb[0].mxu0
  %v1875 = vadd.f32 0.0, %v1874
  %v1876 = vpop.f32.mrb[0].mxu0
  %1877 = vmatprep.mubr.bf16.mxu0 %v907
  %1878 = vmatmul.mubr.bf16.gmra.mrb[0].mxu0 %v906
  %v1879 = vpop.f32.mrb[0].mxu0
  %v1880 = vadd.f32 0.0, %v1879
  %v1881 = vpop.f32.mrb[0].mxu0
  %v1882 = vpop.f32.mrb[0].mxu0
  %v1883 = vadd.f32 0.0, %v1882
  %v1884 = vpop.f32.mrb[0].mxu0
  %1885 = vmatprep.mubr.bf16.mxu0 %v910
  %1886 = vmatmul.mubr.bf16.gmra.mrb[0].mxu0 %v909
  %v1887 = vpop.f32.mrb[0].mxu0
  %v1888 = vadd.f32 0.0, %v1887
  %v1889 = vpop.f32.mrb[0].mxu0
  %v1890 = vpop.f32.mrb[0].mxu0
  %v1891 = vadd.f32 0.0, %v1890
  %v1892 = vpop.f32.mrb[0].mxu0
  %1893 = vmatprep.mubr.bf16.mxu0 %v913
  %1894 = vmatmul.mubr.bf16.gmra.mrb[0].mxu0 %v912
  %v1895 = vpop.f32.mrb[0].mxu0
  %v1896 = vadd.f32 0.0, %v1895
  %v1897 = vpop.f32.mrb[0].mxu0
  %v1898 = vpop.f32.mrb[0].mxu0
  %v1899 = vadd.f32 0.0, %v1898
  %v1900 = vpop.f32.mrb[0].mxu0
  %1901 = vmatprep.mubr.bf16.mxu0 %v916
  %1902 = vmatmul.mubr.bf16.gmra.mrb[0].mxu0 %v915
  %v1903 = vpop.f32.mrb[0].mxu0
  %v1904 = vadd.f32 0.0, %v1903
  %v1905 = vpop.f32.mrb[0].mxu0
  %v1906 = vpop.f32.mrb[0].mxu0
  %v1907 = vadd.f32 0.0, %v1906
  %v1908 = vpop.f32.mrb[0].mxu0
  %1909 = vmatprep.mubr.bf16.mxu0 %v919
  %1910 = vmatmul.mubr.bf16.gmra.mrb[0].mxu0 %v918
  %v1911 = vpop.f32.mrb[0].mxu0
  %v1912 = vadd.f32 0.0, %v1911
  %v1913 = vpop.f32.mrb[0].mxu0
  %v1914 = vpop.f32.mrb[0].mxu0
  %v1915 = vadd.f32 0.0, %v1914
  %v1916 = vpop.f32.mrb[0].mxu0
  %1917 = vmatprep.mubr.bf16.mxu0 %v922
  %1918 = vmatmul.mubr.bf16.gmra.mrb[0].mxu0 %v921
  %v1919 = vpop.f32.mrb[0].mxu0
  %v1920 = vadd.f32 0.0, %v1919
  %v1921 = vpop.f32.mrb[0].mxu0
  %v1922 = vpop.f32.mrb[0].mxu0
  %v1923 = vadd.f32 0.0, %v1922
  %v1924 = vpop.f32.mrb[0].mxu0
  %1925 = vmatprep.mubr.bf16.mxu0 %v925
  %1926 = vmatmul.mubr.bf16.gmra.mrb[0].mxu0 %v924
  %v1927 = vpop.f32.mrb[0].mxu0
  %v1928 = vadd.f32 0.0, %v1927
  %v1929 = vpop.f32.mrb[0].mxu0
  %v1930 = vpop.f32.mrb[0].mxu0
  %v1931 = vadd.f32 0.0, %v1930
  %v1932 = vpop.f32.mrb[0].mxu0
  %1933 = vmatprep.mubr.bf16.mxu0 %v928
  %1934 = vmatmul.mubr.bf16.gmra.mrb[0].mxu0 %v927
  %v1935 = vpop.f32.mrb[0].mxu0
  %v1936 = vadd.f32 0.0, %v1935
  %v1937 = vpop.f32.mrb[0].mxu0
  %v1938 = vpop.f32.mrb[0].mxu0
  %v1939 = vadd.f32 0.0, %v1938
  %v1940 = vpop.f32.mrb[0].mxu0
  %1941 = vmatprep.mubr.bf16.mxu0 %v931
  %1942 = vmatmul.mubr.bf16.gmra.mrb[0].mxu0 %v930
  %v1943 = vpop.f32.mrb[0].mxu0
  %v1944 = vadd.f32 0.0, %v1943
  %v1945 = vpop.f32.mrb[0].mxu0
  %v1946 = vpop.f32.mrb[0].mxu0
  %v1947 = vadd.f32 0.0, %v1946
  %v1948 = vpop.f32.mrb[0].mxu0
  %1949 = vmatprep.mubr.bf16.mxu0 %v934
  %1950 = vmatmul.mubr.bf16.gmra.mrb[0].mxu0 %v933
  %v1951 = vpop.f32.mrb[0].mxu0
  %v1952 = vadd.f32 0.0, %v1951
  %v1953 = vpop.f32.mrb[0].mxu0
  %v1954 = vpop.f32.mrb[0].mxu0
  %v1955 = vadd.f32 0.0, %v1954
  %v1956 = vpop.f32.mrb[0].mxu0
  %1957 = vmatprep.mubr.bf16.mxu0 %v937
  %1958 = vmatmul.mubr.bf16.gmra.mrb[0].mxu0 %v936
  %v1959 = vpop.f32.mrb[0].mxu0
  %v1960 = vadd.f32 0.0, %v1959
  %v1961 = vpop.f32.mrb[0].mxu0
  %v1962 = vpop.f32.mrb[0].mxu0
  %v1963 = vadd.f32 0.0, %v1962
  %v1964 = vpop.f32.mrb[0].mxu0
  %1965 = vdwg.mxu0
  %1966 = vmatprep.subr.bf16.mxu0 0
  %1967 = vmatpush1.bf16.msra.mxu0 %v1325
  %1968 = vmatprep.subr.bf16.mxu0 0
  %1969 = vmatpush1.bf16.msra.mxu0 %v1328
  %1970 = vmatprep.subr.bf16.mxu0 0
  %1971 = vmatpush1.bf16.msra.mxu0 %v1331
  %1972 = vmatprep.subr.bf16.mxu0 0
  %1973 = vmatpush1.bf16.msra.mxu0 %v1334
  %1974 = vmatprep.subr.bf16.mxu0 0
  %1975 = vmatpush1.bf16.msra.mxu0 %v1337
  %1976 = vmatprep.subr.bf16.mxu0 0
  %1977 = vmatpush1.bf16.msra.mxu0 %v1340
  %1978 = vmatprep.subr.bf16.mxu0 0
  %1979 = vmatpush1.bf16.msra.mxu0 %v1343
  %1980 = vmatprep.subr.bf16.mxu0 0
  %1981 = vmatpush1.bf16.msra.mxu0 %v1346
  %1982 = vmatprep.subr.bf16.mxu0 0
  %1983 = vmatpush1.bf16.msra.mxu0 0
  %1984 = vmatprep.subr.bf16.mxu0 0
  %1985 = vmatpush1.bf16.msra.mxu0 0
  %1986 = vmatprep.subr.bf16.mxu0 0
  %1987 = vmatpush1.bf16.msra.mxu0 0
  %1988 = vmatprep.subr.bf16.mxu0 0
  %1989 = vmatpush1.bf16.msra.mxu0 0
  %1990 = vmatprep.subr.bf16.mxu0 0
  %1991 = vmatpush1.bf16.msra.mxu0 0
  %1992 = vmatprep.subr.bf16.mxu0 0
  %1993 = vmatpush1.bf16.msra.mxu0 0
  %1994 = vmatprep.subr.bf16.mxu0 0
  %1995 = vmatpush1.bf16.msra.mxu0 0
  %1996 = vmatprep.subr.bf16.mxu0 0
  %1997 = vmatpush1.bf16.msra.mxu0 0
  %1998 = vmatprep.mubr.bf16.mxu0 0
  %1999 = vmatmul.mubr.bf16.gmra.mrb[0].mxu0 %v893
  %v2000 = vpop.f32.mrb[0].mxu0
  %v2001 = vadd.f32 %v1840, %v2000
  %v2002 = vpop.f32.mrb[0].mxu0
  %v2003 = vpop.f32.mrb[0].mxu0
  %v2004 = vadd.f32 %v1843, %v2003
  %v2005 = vpop.f32.mrb[0].mxu0
  %2006 = vmatprep.mubr.bf16.mxu0 0
  %2007 = vmatmul.mubr.bf16.gmra.mrb[0].mxu0 %v896
  %v2008 = vpop.f32.mrb[0].mxu0
  %v2009 = vadd.f32 %v1848, %v2008
  %v2010 = vpop.f32.mrb[0].mxu0
  %v2011 = vpop.f32.mrb[0].mxu0
  %v2012 = vadd.f32 %v1851, %v2011
  %v2013 = vpop.f32.mrb[0].mxu0
  %2014 = vmatprep.mubr.bf16.mxu0 0
  %2015 = vmatmul.mubr.bf16.gmra.mrb[0].mxu0 %v899
  %v2016 = vpop.f32.mrb[0].mxu0
  %v2017 = vadd.f32 %v1856, %v2016
  %v2018 = vpop.f32.mrb[0].mxu0
  %v2019 = vpop.f32.mrb[0].mxu0
  %v2020 = vadd.f32 %v1859, %v2019
  %v2021 = vpop.f32.mrb[0].mxu0
  %2022 = vmatprep.mubr.bf16.mxu0 0
  %2023 = vmatmul.mubr.bf16.gmra.mrb[0].mxu0 %v902
  %v2024 = vpop.f32.mrb[0].mxu0
  %v2025 = vadd.f32 %v1864, %v2024
  %v2026 = vpop.f32.mrb[0].mxu0
  %v2027 = vpop.f32.mrb[0].mxu0
  %v2028 = vadd.f32 %v1867, %v2027
  %v2029 = vpop.f32.mrb[0].mxu0
  %2030 = vmatprep.mubr.bf16.mxu0 0
  %2031 = vmatmul.mubr.bf16.gmra.mrb[0].mxu0 %v905
  %v2032 = vpop.f32.mrb[0].mxu0
  %v2033 = vadd.f32 %v1872, %v2032
  %v2034 = vpop.f32.mrb[0].mxu0
  %v2035 = vpop.f32.mrb[0].mxu0
  %v2036 = vadd.f32 %v1875, %v2035
  %v2037 = vpop.f32.mrb[0].mxu0
  %2038 = vmatprep.mubr.bf16.mxu0 0
  %2039 = vmatmul.mubr.bf16.gmra.mrb[0].mxu0 %v908
  %v2040 = vpop.f32.mrb[0].mxu0
  %v2041 = vadd.f32 %v1880, %v2040
  %v2042 = vpop.f32.mrb[0].mxu0
  %v2043 = vpop.f32.mrb[0].mxu0
  %v2044 = vadd.f32 %v1883, %v2043
  %v2045 = vpop.f32.mrb[0].mxu0
  %2046 = vmatprep.mubr.bf16.mxu0 0
  %2047 = vmatmul.mubr.bf16.gmra.mrb[0].mxu0 %v911
  %v2048 = vpop.f32.mrb[0].mxu0
  %v2049 = vadd.f32 %v1888, %v2048
  %v2050 = vpop.f32.mrb[0].mxu0
  %v2051 = vpop.f32.mrb[0].mxu0
  %v2052 = vadd.f32 %v1891, %v2051
  %v2053 = vpop.f32.mrb[0].mxu0
  %2054 = vmatprep.mubr.bf16.mxu0 0
  %2055 = vmatmul.mubr.bf16.gmra.mrb[0].mxu0 %v914
  %v2056 = vpop.f32.mrb[0].mxu0
  %v2057 = vadd.f32 %v1896, %v2056
  %v2058 = vpop.f32.mrb[0].mxu0
  %v2059 = vpop.f32.mrb[0].mxu0
  %v2060 = vadd.f32 %v1899, %v2059
  %v2061 = vpop.f32.mrb[0].mxu0
  %2062 = vmatprep.mubr.bf16.mxu0 0
  %2063 = vmatmul.mubr.bf16.gmra.mrb[0].mxu0 %v917
  %v2064 = vpop.f32.mrb[0].mxu0
  %v2065 = vadd.f32 %v1904, %v2064
  %v2066 = vpop.f32.mrb[0].mxu0
  %v2067 = vpop.f32.mrb[0].mxu0
  %v2068 = vadd.f32 %v1907, %v2067
  %v2069 = vpop.f32.mrb[0].mxu0
  %2070 = vmatprep.mubr.bf16.mxu0 0
  %2071 = vmatmul.mubr.bf16.gmra.mrb[0].mxu0 %v920
  %v2072 = vpop.f32.mrb[0].mxu0
  %v2073 = vadd.f32 %v1912, %v2072
  %v2074 = vpop.f32.mrb[0].mxu0
  %v2075 = vpop.f32.mrb[0].mxu0
  %v2076 = vadd.f32 %v1915, %v2075
  %v2077 = vpop.f32.mrb[0].mxu0
  %2078 = vmatprep.mubr.bf16.mxu0 0
  %2079 = vmatmul.mubr.bf16.gmra.mrb[0].mxu0 %v923
  %v2080 = vpop.f32.mrb[0].mxu0
  %v2081 = vadd.f32 %v1920, %v2080
  %v2082 = vpop.f32.mrb[0].mxu0
  %v2083 = vpop.f32.mrb[0].mxu0
  %v2084 = vadd.f32 %v1923, %v2083
  %v2085 = vpop.f32.mrb[0].mxu0
  %2086 = vmatprep.mubr.bf16.mxu0 0
  %2087 = vmatmul.mubr.bf16.gmra.mrb[0].mxu0 %v926
  %v2088 = vpop.f32.mrb[0].mxu0
  %v2089 = vadd.f32 %v1928, %v2088
  %v2090 = vpop.f32.mrb[0].mxu0
  %v2091 = vpop.f32.mrb[0].mxu0
  %v2092 = vadd.f32 %v1931, %v2091
  %v2093 = vpop.f32.mrb[0].mxu0
  %2094 = vmatprep.mubr.bf16.mxu0 0
  %2095 = vmatmul.mubr.bf16.gmra.mrb[0].mxu0 %v929
  %v2096 = vpop.f32.mrb[0].mxu0
  %v2097 = vadd.f32 %v1936, %v2096
  %v2098 = vpop.f32.mrb[0].mxu0
  %v2099 = vpop.f32.mrb[0].mxu0
  %v2100 = vadd.f32 %v1939, %v2099
  %v2101 = vpop.f32.mrb[0].mxu0
  %2102 = vmatprep.mubr.bf16.mxu0 0
  %2103 = vmatmul.mubr.bf16.gmra.mrb[0].mxu0 %v932
  %v2104 = vpop.f32.mrb[0].mxu0
  %v2105 = vadd.f32 %v1944, %v2104
  %v2106 = vpop.f32.mrb[0].mxu0
  %v2107 = vpop.f32.mrb[0].mxu0
  %v2108 = vadd.f32 %v1947, %v2107
  %v2109 = vpop.f32.mrb[0].mxu0
  %2110 = vmatprep.mubr.bf16.mxu0 0
  %2111 = vmatmul.mubr.bf16.gmra.mrb[0].mxu0 %v935
  %v2112 = vpop.f32.mrb[0].mxu0
  %v2113 = vadd.f32 %v1952, %v2112
  %v2114 = vpop.f32.mrb[0].mxu0
  %v2115 = vpop.f32.mrb[0].mxu0
  %v2116 = vadd.f32 %v1955, %v2115
  %v2117 = vpop.f32.mrb[0].mxu0
  %2118 = vmatprep.mubr.bf16.mxu0 0
  %2119 = vmatmul.mubr.bf16.gmra.mrb[0].mxu0 %v938
  %v2120 = vpop.f32.mrb[0].mxu0
  %v2121 = vadd.f32 %v1960, %v2120
  %v2122 = vpop.f32.mrb[0].mxu0
  %v2123 = vpop.f32.mrb[0].mxu0
  %v2124 = vadd.f32 %v1963, %v2123
  %v2125 = vpop.f32.mrb[0].mxu0
  %2126 = vdwg.mxu0
  %v2127 = vpack.c.bf16 %v1651, %v1647
  %v2128 = vpack.c.bf16 %v1653, %v1649
  %v2129 = vpack.c.bf16 %v2004, %v2001
  %v2130 = vpack.c.bf16 %v1661, %v1657
  %v2131 = vpack.c.bf16 %v1663, %v1659
  %v2132 = vpack.c.bf16 %v2012, %v2009
  %v2133 = vpack.c.bf16 %v1671, %v1667
  %v2134 = vpack.c.bf16 %v1673, %v1669
  %v2135 = vpack.c.bf16 %v2020, %v2017
  %v2136 = vpack.c.bf16 %v1681, %v1677
  %v2137 = vpack.c.bf16 %v1683, %v1679
  %v2138 = vpack.c.bf16 %v2028, %v2025
  %v2139 = vpack.c.bf16 %v1691, %v1687
  %v2140 = vpack.c.bf16 %v1693, %v1689
  %v2141 = vpack.c.bf16 %v2036, %v2033
  %v2142 = vpack.c.bf16 %v1701, %v1697
  %v2143 = vpack.c.bf16 %v1703, %v1699
  %v2144 = vpack.c.bf16 %v2044, %v2041
  %v2145 = vpack.c.bf16 %v1711, %v1707
  %v2146 = vpack.c.bf16 %v1713, %v1709
  %v2147 = vpack.c.bf16 %v2052, %v2049
  %v2148 = vpack.c.bf16 %v1721, %v1717
  %v2149 = vpack.c.bf16 %v1723, %v1719
  %v2150 = vpack.c.bf16 %v2060, %v2057
  %v2151 = vpack.c.bf16 %v1731, %v1727
  %v2152 = vpack.c.bf16 %v1733, %v1729
  %v2153 = vpack.c.bf16 %v2068, %v2065
  %v2154 = vpack.c.bf16 %v1741, %v1737
  %v2155 = vpack.c.bf16 %v1743, %v1739
  %v2156 = vpack.c.bf16 %v2076, %v2073
  %v2157 = vpack.c.bf16 %v1751, %v1747
  %v2158 = vpack.c.bf16 %v1753, %v1749
  %v2159 = vpack.c.bf16 %v2084, %v2081
  %v2160 = vpack.c.bf16 %v1761, %v1757
  %v2161 = vpack.c.bf16 %v1763, %v1759
  %v2162 = vpack.c.bf16 %v2092, %v2089
  %v2163 = vpack.c.bf16 %v1771, %v1767
  %v2164 = vpack.c.bf16 %v1773, %v1769
  %v2165 = vpack.c.bf16 %v2100, %v2097
  %v2166 = vpack.c.bf16 %v1781, %v1777
  %v2167 = vpack.c.bf16 %v1783, %v1779
  %v2168 = vpack.c.bf16 %v2108, %v2105
  %v2169 = vpack.c.bf16 %v1791, %v1787
  %v2170 = vpack.c.bf16 %v1793, %v1789
  %v2171 = vpack.c.bf16 %v2116, %v2113
  %v2172 = vpack.c.bf16 %v1801, %v1797
  %v2173 = vpack.c.bf16 %v1803, %v1799
  %v2174 = vpack.c.bf16 %v2124, %v2121
  %v2175 = vmax.bf16 %v2127, 0
  %v2176 = vmax.bf16 %v2128, 0
  %v2177 = vmax.bf16 %v2129, 0
  %v2178 = vmax.bf16 %v2130, 0
  %v2179 = vmax.bf16 %v2131, 0
  %v2180 = vmax.bf16 %v2132, 0
  %v2181 = vmax.bf16 %v2133, 0
  %v2182 = vmax.bf16 %v2134, 0
  %v2183 = vmax.bf16 %v2135, 0
  %v2184 = vmax.bf16 %v2136, 0
  %v2185 = vmax.bf16 %v2137, 0
  %v2186 = vmax.bf16 %v2138, 0
  %v2187 = vmax.bf16 %v2139, 0
  %v2188 = vmax.bf16 %v2140, 0
  %v2189 = vmax.bf16 %v2141, 0
  %v2190 = vmax.bf16 %v2142, 0
  %v2191 = vmax.bf16 %v2143, 0
  %v2192 = vmax.bf16 %v2144, 0
  %v2193 = vmax.bf16 %v2145, 0
  %v2194 = vmax.bf16 %v2146, 0
  %v2195 = vmax.bf16 %v2147, 0
  %v2196 = vmax.bf16 %v2148, 0
  %v2197 = vmax.bf16 %v2149, 0
  %v2198 = vmax.bf16 %v2150, 0
  %v2199 = vmax.bf16 %v2151, 0
  %v2200 = vmax.bf16 %v2152, 0
  %v2201 = vmax.bf16 %v2153, 0
  %v2202 = vmax.bf16 %v2154, 0
  %v2203 = vmax.bf16 %v2155, 0
  %v2204 = vmax.bf16 %v2156, 0
  %v2205 = vmax.bf16 %v2157, 0
  %v2206 = vmax.bf16 %v2158, 0
  %v2207 = vmax.bf16 %v2159, 0
  %v2208 = vmax.bf16 %v2160, 0
  %v2209 = vmax.bf16 %v2161, 0
  %v2210 = vmax.bf16 %v2162, 0
  %v2211 = vmax.bf16 %v2163, 0
  %v2212 = vmax.bf16 %v2164, 0
  %v2213 = vmax.bf16 %v2165, 0
  %v2214 = vmax.bf16 %v2166, 0
  %v2215 = vmax.bf16 %v2167, 0
  %v2216 = vmax.bf16 %v2168, 0
  %v2217 = vmax.bf16 %v2169, 0
  %v2218 = vmax.bf16 %v2170, 0
  %v2219 = vmax.bf16 %v2171, 0
  %v2220 = vmax.bf16 %v2172, 0
  %v2221 = vmax.bf16 %v2173, 0
  %v2222 = vmax.bf16 %v2174, 0
  %v2223 = vld [vmem:[%s5] sm:$0xf]
  %v2224 = vld [vmem:[%s5 + $0x4] sm:$0xf]
  %v2225 = vld [vmem:[%s5 + $0x8] sm:$0xf]
  %v2226 = vld [vmem:[%s5 + $0xc] sm:$0xf]
  %v2227 = vld [vmem:[%s5 + $0x10] sm:$0xf]
  %v2228 = vld [vmem:[%s5 + $0x14] sm:$0xf]
  %v2229 = vld [vmem:[%s5 + $0x18] sm:$0xf]
  %v2230 = vld [vmem:[%s5 + $0x1c] sm:$0xf]
  %v2231 = vld [vmem:[%s5 + $0x20] sm:$0xf]
  %v2232 = vld [vmem:[%s5 + $0x24] sm:$0xf]
  %v2233 = vld [vmem:[%s5 + $0x28] sm:$0xf]
  %v2234 = vld [vmem:[%s5 + $0x2c] sm:$0xf]
  %v2235 = vld [vmem:[%s5 + $0x30] sm:$0xf]
  %v2236 = vld [vmem:[%s5 + $0x34] sm:$0xf]
  %v2237 = vld [vmem:[%s5 + $0x38] sm:$0xf]
  %v2238 = vld [vmem:[%s5 + $0x3c] sm:$0xf]
  %v2239 = vld [vmem:[%s5 + $0x40] sm:$0xf]
  %v2240 = vld [vmem:[%s5 + $0x44] sm:$0xf]
  %v2241 = vld [vmem:[%s5 + $0x48] sm:$0xf]
  %v2242 = vld [vmem:[%s5 + $0x4c] sm:$0xf]
  %v2243 = vld [vmem:[%s5 + $0x50] sm:$0xf]
  %v2244 = vld [vmem:[%s5 + $0x54] sm:$0xf]
  %v2245 = vld [vmem:[%s5 + $0x58] sm:$0xf]
  %v2246 = vld [vmem:[%s5 + $0x5c] sm:$0xf]
  %v2247 = vld [vmem:[%s5 + $0x60] sm:$0xf]
  %v2248 = vld [vmem:[%s5 + $0x64] sm:$0xf]
  %v2249 = vld [vmem:[%s5 + $0x68] sm:$0xf]
  %v2250 = vld [vmem:[%s5 + $0x6c] sm:$0xf]
  %v2251 = vld [vmem:[%s5 + $0x70] sm:$0xf]
  %v2252 = vld [vmem:[%s5 + $0x74] sm:$0xf]
  %v2253 = vld [vmem:[%s5 + $0x78] sm:$0xf]
  %v2254 = vld [vmem:[%s5 + $0x7c] sm:$0xf]
  %v2255 = vld [vmem:[%s5 + $0x80] sm:$0xf]
  %v2256 = vld [vmem:[%s5 + $0x84] sm:$0xf]
  %v2257 = vld [vmem:[%s5 + $0x88] sm:$0xf]
  %v2258 = vld [vmem:[%s5 + $0x8c] sm:$0xf]
  %v2259 = vld [vmem:[%s5 + $0x90] sm:$0xf]
  %v2260 = vld [vmem:[%s5 + $0x94] sm:$0xf]
  %v2261 = vld [vmem:[%s5 + $0x98] sm:$0xf]
  %v2262 = vld [vmem:[%s5 + $0x9c] sm:$0xf]
  %v2263 = vld [vmem:[%s5 + $0xa0] sm:$0xf]
  %v2264 = vld [vmem:[%s5 + $0xa4] sm:$0xf]
  %v2265 = vld [vmem:[%s5 + $0xa8] sm:$0xf]
  %v2266 = vld [vmem:[%s5 + $0xac] sm:$0xf]
  %v2267 = vld [vmem:[%s5 + $0xb0] sm:$0xf]
  %v2268 = vld [vmem:[%s5 + $0xb4] sm:$0xf]
  %v2269 = vld [vmem:[%s5 + $0xb8] sm:$0xf]
  %v2270 = vld [vmem:[%s5 + $0xbc] sm:$0xf]
  %v2319 = vunpack.c.l.b16 %v2223
  %v2320 = vunpack.c.l.b16 %v2224
  %v2321 = vunpack.c.l.b16 %v2225
  %v2322 = vunpack.c.l.b16 %v2226
  %v2323 = vunpack.c.l.b16 %v2227
  %v2324 = vunpack.c.l.b16 %v2228
  %v2325 = vunpack.c.l.b16 %v2229
  %v2326 = vunpack.c.l.b16 %v2230
  %v2327 = vunpack.c.l.b16 %v2231
  %v2328 = vunpack.c.l.b16 %v2232
  %v2329 = vunpack.c.l.b16 %v2233
  %v2330 = vunpack.c.l.b16 %v2234
  %v2331 = vunpack.c.l.b16 %v2235
  %v2332 = vunpack.c.l.b16 %v2236
  %v2333 = vunpack.c.l.b16 %v2237
  %v2334 = vunpack.c.l.b16 %v2238
  %v2335 = vunpack.c.l.b16 %v2239
  %v2336 = vunpack.c.l.b16 %v2240
  %v2337 = vunpack.c.l.b16 %v2241
  %v2338 = vunpack.c.l.b16 %v2242
  %v2339 = vunpack.c.l.b16 %v2243
  %v2340 = vunpack.c.l.b16 %v2244
  %v2341 = vunpack.c.l.b16 %v2245
  %v2342 = vunpack.c.l.b16 %v2246
  %v2343 = vunpack.c.l.b16 %v2247
  %v2344 = vunpack.c.l.b16 %v2248
  %v2345 = vunpack.c.l.b16 %v2249
  %v2346 = vunpack.c.l.b16 %v2250
  %v2347 = vunpack.c.l.b16 %v2251
  %v2348 = vunpack.c.l.b16 %v2252
  %v2349 = vunpack.c.l.b16 %v2253
  %v2350 = vunpack.c.l.b16 %v2254
  %v2351 = vunpack.c.l.b16 %v2255
  %v2352 = vunpack.c.l.b16 %v2256
  %v2353 = vunpack.c.l.b16 %v2257
  %v2354 = vunpack.c.l.b16 %v2258
  %v2355 = vunpack.c.l.b16 %v2259
  %v2356 = vunpack.c.l.b16 %v2260
  %v2357 = vunpack.c.l.b16 %v2261
  %v2358 = vunpack.c.l.b16 %v2262
  %v2359 = vunpack.c.l.b16 %v2263
  %v2360 = vunpack.c.l.b16 %v2264
  %v2361 = vunpack.c.l.b16 %v2265
  %v2362 = vunpack.c.l.b16 %v2266
  %v2363 = vunpack.c.l.b16 %v2267
  %v2364 = vunpack.c.l.b16 %v2268
  %v2365 = vunpack.c.l.b16 %v2269
  %v2366 = vunpack.c.l.b16 %v2270
  %v2367 = vpack.c.b16 %v2320, %v2319
  %v2368 = vpack.c.b16 %v2322, %v2321
  %v2369 = vpack.c.b16 %v2324, %v2323
  %v2370 = vpack.c.b16 %v2326, %v2325
  %v2371 = vpack.c.b16 %v2328, %v2327
  %v2372 = vpack.c.b16 %v2330, %v2329
  %v2373 = vpack.c.b16 %v2332, %v2331
  %v2374 = vpack.c.b16 %v2334, %v2333
  %v2375 = vpack.c.b16 %v2336, %v2335
  %v2376 = vpack.c.b16 %v2338, %v2337
  %v2377 = vpack.c.b16 %v2340, %v2339
  %v2378 = vpack.c.b16 %v2342, %v2341
  %v2379 = vpack.c.b16 %v2344, %v2343
  %v2380 = vpack.c.b16 %v2346, %v2345
  %v2381 = vpack.c.b16 %v2348, %v2347
  %v2382 = vpack.c.b16 %v2350, %v2349
  %v2383 = vpack.c.b16 %v2352, %v2351
  %v2384 = vpack.c.b16 %v2354, %v2353
  %v2385 = vpack.c.b16 %v2356, %v2355
  %v2386 = vpack.c.b16 %v2358, %v2357
  %v2387 = vpack.c.b16 %v2360, %v2359
  %v2388 = vpack.c.b16 %v2362, %v2361
  %v2389 = vpack.c.b16 %v2364, %v2363
  %v2390 = vpack.c.b16 %v2366, %v2365
  %2415 = vmatprep.subr.bf16.mxu0 0
  %2416 = vmatpush1.bf16.msra.mxu0 %v2367
  %2417 = vmatprep.subr.bf16.mxu0 0
  %2418 = vmatpush1.bf16.msra.mxu0 %v2368
  %2419 = vmatprep.subr.bf16.mxu0 0
  %2420 = vmatpush1.bf16.msra.mxu0 %v2369
  %2421 = vmatprep.subr.bf16.mxu0 0
  %2422 = vmatpush1.bf16.msra.mxu0 %v2370
  %2423 = vmatprep.subr.bf16.mxu0 0
  %2424 = vmatpush1.bf16.msra.mxu0 %v2371
  %2425 = vmatprep.subr.bf16.mxu0 0
  %2426 = vmatpush1.bf16.msra.mxu0 %v2372
  %2427 = vmatprep.subr.bf16.mxu0 0
  %2428 = vmatpush1.bf16.msra.mxu0 %v2373
  %2429 = vmatprep.subr.bf16.mxu0 0
  %2430 = vmatpush1.bf16.msra.mxu0 %v2374
  %2431 = vmatprep.subr.bf16.mxu0 0
  %2432 = vmatpush1.bf16.msra.mxu0 %v2375
  %2433 = vmatprep.subr.bf16.mxu0 0
  %2434 = vmatpush1.bf16.msra.mxu0 %v2376
  %2435 = vmatprep.subr.bf16.mxu0 0
  %2436 = vmatpush1.bf16.msra.mxu0 %v2377
  %2437 = vmatprep.subr.bf16.mxu0 0
  %2438 = vmatpush1.bf16.msra.mxu0 %v2378
  %2439 = vmatprep.subr.bf16.mxu0 0
  %2440 = vmatpush1.bf16.msra.mxu0 %v2379
  %2441 = vmatprep.subr.bf16.mxu0 0
  %2442 = vmatpush1.bf16.msra.mxu0 %v2380
  %2443 = vmatprep.subr.bf16.mxu0 0
  %2444 = vmatpush1.bf16.msra.mxu0 %v2381
  %2445 = vmatprep.subr.bf16.mxu0 0
  %2446 = vmatpush1.bf16.msra.mxu0 %v2382
  %2447 = vmatprep.mubr.bf16.mxu0 %v2176
  %2448 = vmatmul.mubr.bf16.gmra.mrb[0].mxu0 %v2175
  %v2449 = vpop.f32.mrb[0].mxu0
  %v2450 = vadd.f32 0.0, %v2449
  %v2451 = vpop.f32.mrb[0].mxu0
  %v2452 = vpop.f32.mrb[0].mxu0
  %v2453 = vadd.f32 0.0, %v2452
  %v2454 = vpop.f32.mrb[0].mxu0
  %2455 = vmatprep.mubr.bf16.mxu0 %v2179
  %2456 = vmatmul.mubr.bf16.gmra.mrb[0].mxu0 %v2178
  %v2457 = vpop.f32.mrb[0].mxu0
  %v2458 = vadd.f32 0.0, %v2457
  %v2459 = vpop.f32.mrb[0].mxu0
  %v2460 = vpop.f32.mrb[0].mxu0
  %v2461 = vadd.f32 0.0, %v2460
  %v2462 = vpop.f32.mrb[0].mxu0
  %2463 = vmatprep.mubr.bf16.mxu0 %v2182
  %2464 = vmatmul.mubr.bf16.gmra.mrb[0].mxu0 %v2181
  %v2465 = vpop.f32.mrb[0].mxu0
  %v2466 = vadd.f32 0.0, %v2465
  %v2467 = vpop.f32.mrb[0].mxu0
  %v2468 = vpop.f32.mrb[0].mxu0
  %v2469 = vadd.f32 0.0, %v2468
  %v2470 = vpop.f32.mrb[0].mxu0
  %2471 = vmatprep.mubr.bf16.mxu0 %v2185
  %2472 = vmatmul.mubr.bf16.gmra.mrb[0].mxu0 %v2184
  %v2473 = vpop.f32.mrb[0].mxu0
  %v2474 = vadd.f32 0.0, %v2473
  %v2475 = vpop.f32.mrb[0].mxu0
  %v2476 = vpop.f32.mrb[0].mxu0
  %v2477 = vadd.f32 0.0, %v2476
  %v2478 = vpop.f32.mrb[0].mxu0
  %2479 = vmatprep.mubr.bf16.mxu0 %v2188
  %2480 = vmatmul.mubr.bf16.gmra.mrb[0].mxu0 %v2187
  %v2481 = vpop.f32.mrb[0].mxu0
  %v2482 = vadd.f32 0.0, %v2481
  %v2483 = vpop.f32.mrb[0].mxu0
  %v2484 = vpop.f32.mrb[0].mxu0
  %v2485 = vadd.f32 0.0, %v2484
  %v2486 = vpop.f32.mrb[0].mxu0
  %2487 = vmatprep.mubr.bf16.mxu0 %v2191
  %2488 = vmatmul.mubr.bf16.gmra.mrb[0].mxu0 %v2190
  %v2489 = vpop.f32.mrb[0].mxu0
  %v2490 = vadd.f32 0.0, %v2489
  %v2491 = vpop.f32.mrb[0].mxu0
  %v2492 = vpop.f32.mrb[0].mxu0
  %v2493 = vadd.f32 0.0, %v2492
  %v2494 = vpop.f32.mrb[0].mxu0
  %2495 = vmatprep.mubr.bf16.mxu0 %v2194
  %2496 = vmatmul.mubr.bf16.gmra.mrb[0].mxu0 %v2193
  %v2497 = vpop.f32.mrb[0].mxu0
  %v2498 = vadd.f32 0.0, %v2497
  %v2499 = vpop.f32.mrb[0].mxu0
  %v2500 = vpop.f32.mrb[0].mxu0
  %v2501 = vadd.f32 0.0, %v2500
  %v2502 = vpop.f32.mrb[0].mxu0
  %2503 = vmatprep.mubr.bf16.mxu0 %v2197
  %2504 = vmatmul.mubr.bf16.gmra.mrb[0].mxu0 %v2196
  %v2505 = vpop.f32.mrb[0].mxu0
  %v2506 = vadd.f32 0.0, %v2505
  %v2507 = vpop.f32.mrb[0].mxu0
  %v2508 = vpop.f32.mrb[0].mxu0
  %v2509 = vadd.f32 0.0, %v2508
  %v2510 = vpop.f32.mrb[0].mxu0
  %2511 = vmatprep.mubr.bf16.mxu0 %v2200
  %2512 = vmatmul.mubr.bf16.gmra.mrb[0].mxu0 %v2199
  %v2513 = vpop.f32.mrb[0].mxu0
  %v2514 = vadd.f32 0.0, %v2513
  %v2515 = vpop.f32.mrb[0].mxu0
  %v2516 = vpop.f32.mrb[0].mxu0
  %v2517 = vadd.f32 0.0, %v2516
  %v2518 = vpop.f32.mrb[0].mxu0
  %2519 = vmatprep.mubr.bf16.mxu0 %v2203
  %2520 = vmatmul.mubr.bf16.gmra.mrb[0].mxu0 %v2202
  %v2521 = vpop.f32.mrb[0].mxu0
  %v2522 = vadd.f32 0.0, %v2521
  %v2523 = vpop.f32.mrb[0].mxu0
  %v2524 = vpop.f32.mrb[0].mxu0
  %v2525 = vadd.f32 0.0, %v2524
  %v2526 = vpop.f32.mrb[0].mxu0
  %2527 = vmatprep.mubr.bf16.mxu0 %v2206
  %2528 = vmatmul.mubr.bf16.gmra.mrb[0].mxu0 %v2205
  %v2529 = vpop.f32.mrb[0].mxu0
  %v2530 = vadd.f32 0.0, %v2529
  %v2531 = vpop.f32.mrb[0].mxu0
  %v2532 = vpop.f32.mrb[0].mxu0
  %v2533 = vadd.f32 0.0, %v2532
  %v2534 = vpop.f32.mrb[0].mxu0
  %2535 = vmatprep.mubr.bf16.mxu0 %v2209
  %2536 = vmatmul.mubr.bf16.gmra.mrb[0].mxu0 %v2208
  %v2537 = vpop.f32.mrb[0].mxu0
  %v2538 = vadd.f32 0.0, %v2537
  %v2539 = vpop.f32.mrb[0].mxu0
  %v2540 = vpop.f32.mrb[0].mxu0
  %v2541 = vadd.f32 0.0, %v2540
  %v2542 = vpop.f32.mrb[0].mxu0
  %2543 = vmatprep.mubr.bf16.mxu0 %v2212
  %2544 = vmatmul.mubr.bf16.gmra.mrb[0].mxu0 %v2211
  %v2545 = vpop.f32.mrb[0].mxu0
  %v2546 = vadd.f32 0.0, %v2545
  %v2547 = vpop.f32.mrb[0].mxu0
  %v2548 = vpop.f32.mrb[0].mxu0
  %v2549 = vadd.f32 0.0, %v2548
  %v2550 = vpop.f32.mrb[0].mxu0
  %2551 = vmatprep.mubr.bf16.mxu0 %v2215
  %2552 = vmatmul.mubr.bf16.gmra.mrb[0].mxu0 %v2214
  %v2553 = vpop.f32.mrb[0].mxu0
  %v2554 = vadd.f32 0.0, %v2553
  %v2555 = vpop.f32.mrb[0].mxu0
  %v2556 = vpop.f32.mrb[0].mxu0
  %v2557 = vadd.f32 0.0, %v2556
  %v2558 = vpop.f32.mrb[0].mxu0
  %2559 = vmatprep.mubr.bf16.mxu0 %v2218
  %2560 = vmatmul.mubr.bf16.gmra.mrb[0].mxu0 %v2217
  %v2561 = vpop.f32.mrb[0].mxu0
  %v2562 = vadd.f32 0.0, %v2561
  %v2563 = vpop.f32.mrb[0].mxu0
  %v2564 = vpop.f32.mrb[0].mxu0
  %v2565 = vadd.f32 0.0, %v2564
  %v2566 = vpop.f32.mrb[0].mxu0
  %2567 = vmatprep.mubr.bf16.mxu0 %v2221
  %2568 = vmatmul.mubr.bf16.gmra.mrb[0].mxu0 %v2220
  %v2569 = vpop.f32.mrb[0].mxu0
  %v2570 = vadd.f32 0.0, %v2569
  %v2571 = vpop.f32.mrb[0].mxu0
  %v2572 = vpop.f32.mrb[0].mxu0
  %v2573 = vadd.f32 0.0, %v2572
  %v2574 = vpop.f32.mrb[0].mxu0
  %2575 = vdwg.mxu0
  %2576 = vmatprep.subr.bf16.mxu0 0
  %2577 = vmatpush1.bf16.msra.mxu0 %v2383
  %2578 = vmatprep.subr.bf16.mxu0 0
  %2579 = vmatpush1.bf16.msra.mxu0 %v2384
  %2580 = vmatprep.subr.bf16.mxu0 0
  %2581 = vmatpush1.bf16.msra.mxu0 %v2385
  %2582 = vmatprep.subr.bf16.mxu0 0
  %2583 = vmatpush1.bf16.msra.mxu0 %v2386
  %2584 = vmatprep.subr.bf16.mxu0 0
  %2585 = vmatpush1.bf16.msra.mxu0 %v2387
  %2586 = vmatprep.subr.bf16.mxu0 0
  %2587 = vmatpush1.bf16.msra.mxu0 %v2388
  %2588 = vmatprep.subr.bf16.mxu0 0
  %2589 = vmatpush1.bf16.msra.mxu0 %v2389
  %2590 = vmatprep.subr.bf16.mxu0 0
  %2591 = vmatpush1.bf16.msra.mxu0 %v2390
  %2592 = vmatprep.subr.bf16.mxu0 0
  %2593 = vmatpush1.bf16.msra.mxu0 0
  %2594 = vmatprep.subr.bf16.mxu0 0
  %2595 = vmatpush1.bf16.msra.mxu0 0
  %2596 = vmatprep.subr.bf16.mxu0 0
  %2597 = vmatpush1.bf16.msra.mxu0 0
  %2598 = vmatprep.subr.bf16.mxu0 0
  %2599 = vmatpush1.bf16.msra.mxu0 0
  %2600 = vmatprep.subr.bf16.mxu0 0
  %2601 = vmatpush1.bf16.msra.mxu0 0
  %2602 = vmatprep.subr.bf16.mxu0 0
  %2603 = vmatpush1.bf16.msra.mxu0 0
  %2604 = vmatprep.subr.bf16.mxu0 0
  %2605 = vmatpush1.bf16.msra.mxu0 0
  %2606 = vmatprep.subr.bf16.mxu0 0
  %2607 = vmatpush1.bf16.msra.mxu0 0
  %2608 = vmatprep.mubr.bf16.mxu0 0
  %2609 = vmatmul.mubr.bf16.gmra.mrb[0].mxu0 %v2177
  %v2610 = vpop.f32.mrb[0].mxu0
  %v2611 = vadd.f32 %v2450, %v2610
  %v2612 = vpop.f32.mrb[0].mxu0
  %v2613 = vpop.f32.mrb[0].mxu0
  %v2614 = vadd.f32 %v2453, %v2613
  %v2615 = vpop.f32.mrb[0].mxu0
  %2616 = vmatprep.mubr.bf16.mxu0 0
  %2617 = vmatmul.mubr.bf16.gmra.mrb[0].mxu0 %v2180
  %v2618 = vpop.f32.mrb[0].mxu0
  %v2619 = vadd.f32 %v2458, %v2618
  %v2620 = vpop.f32.mrb[0].mxu0
  %v2621 = vpop.f32.mrb[0].mxu0
  %v2622 = vadd.f32 %v2461, %v2621
  %v2623 = vpop.f32.mrb[0].mxu0
  %2624 = vmatprep.mubr.bf16.mxu0 0
  %2625 = vmatmul.mubr.bf16.gmra.mrb[0].mxu0 %v2183
  %v2626 = vpop.f32.mrb[0].mxu0
  %v2627 = vadd.f32 %v2466, %v2626
  %v2628 = vpop.f32.mrb[0].mxu0
  %v2629 = vpop.f32.mrb[0].mxu0
  %v2630 = vadd.f32 %v2469, %v2629
  %v2631 = vpop.f32.mrb[0].mxu0
  %2632 = vmatprep.mubr.bf16.mxu0 0
  %2633 = vmatmul.mubr.bf16.gmra.mrb[0].mxu0 %v2186
  %v2634 = vpop.f32.mrb[0].mxu0
  %v2635 = vadd.f32 %v2474, %v2634
  %v2636 = vpop.f32.mrb[0].mxu0
  %v2637 = vpop.f32.mrb[0].mxu0
  %v2638 = vadd.f32 %v2477, %v2637
  %v2639 = vpop.f32.mrb[0].mxu0
  %2640 = vmatprep.mubr.bf16.mxu0 0
  %2641 = vmatmul.mubr.bf16.gmra.mrb[0].mxu0 %v2189
  %v2642 = vpop.f32.mrb[0].mxu0
  %v2643 = vadd.f32 %v2482, %v2642
  %v2644 = vpop.f32.mrb[0].mxu0
  %v2645 = vpop.f32.mrb[0].mxu0
  %v2646 = vadd.f32 %v2485, %v2645
  %v2647 = vpop.f32.mrb[0].mxu0
  %2648 = vmatprep.mubr.bf16.mxu0 0
  %2649 = vmatmul.mubr.bf16.gmra.mrb[0].mxu0 %v2192
  %v2650 = vpop.f32.mrb[0].mxu0
  %v2651 = vadd.f32 %v2490, %v2650
  %v2652 = vpop.f32.mrb[0].mxu0
  %v2653 = vpop.f32.mrb[0].mxu0
  %v2654 = vadd.f32 %v2493, %v2653
  %v2655 = vpop.f32.mrb[0].mxu0
  %2656 = vmatprep.mubr.bf16.mxu0 0
  %2657 = vmatmul.mubr.bf16.gmra.mrb[0].mxu0 %v2195
  %v2658 = vpop.f32.mrb[0].mxu0
  %v2659 = vadd.f32 %v2498, %v2658
  %v2660 = vpop.f32.mrb[0].mxu0
  %v2661 = vpop.f32.mrb[0].mxu0
  %v2662 = vadd.f32 %v2501, %v2661
  %v2663 = vpop.f32.mrb[0].mxu0
  %2664 = vmatprep.mubr.bf16.mxu0 0
  %2665 = vmatmul.mubr.bf16.gmra.mrb[0].mxu0 %v2198
  %v2666 = vpop.f32.mrb[0].mxu0
  %v2667 = vadd.f32 %v2506, %v2666
  %v2668 = vpop.f32.mrb[0].mxu0
  %v2669 = vpop.f32.mrb[0].mxu0
  %v2670 = vadd.f32 %v2509, %v2669
  %v2671 = vpop.f32.mrb[0].mxu0
  %2672 = vmatprep.mubr.bf16.mxu0 0
  %2673 = vmatmul.mubr.bf16.gmra.mrb[0].mxu0 %v2201
  %v2674 = vpop.f32.mrb[0].mxu0
  %v2675 = vadd.f32 %v2514, %v2674
  %v2676 = vpop.f32.mrb[0].mxu0
  %v2677 = vpop.f32.mrb[0].mxu0
  %v2678 = vadd.f32 %v2517, %v2677
  %v2679 = vpop.f32.mrb[0].mxu0
  %2680 = vmatprep.mubr.bf16.mxu0 0
  %2681 = vmatmul.mubr.bf16.gmra.mrb[0].mxu0 %v2204
  %v2682 = vpop.f32.mrb[0].mxu0
  %v2683 = vadd.f32 %v2522, %v2682
  %v2684 = vpop.f32.mrb[0].mxu0
  %v2685 = vpop.f32.mrb[0].mxu0
  %v2686 = vadd.f32 %v2525, %v2685
  %v2687 = vpop.f32.mrb[0].mxu0
  %2688 = vmatprep.mubr.bf16.mxu0 0
  %2689 = vmatmul.mubr.bf16.gmra.mrb[0].mxu0 %v2207
  %v2690 = vpop.f32.mrb[0].mxu0
  %v2691 = vadd.f32 %v2530, %v2690
  %v2692 = vpop.f32.mrb[0].mxu0
  %v2693 = vpop.f32.mrb[0].mxu0
  %v2694 = vadd.f32 %v2533, %v2693
  %v2695 = vpop.f32.mrb[0].mxu0
  %2696 = vmatprep.mubr.bf16.mxu0 0
  %2697 = vmatmul.mubr.bf16.gmra.mrb[0].mxu0 %v2210
  %v2698 = vpop.f32.mrb[0].mxu0
  %v2699 = vadd.f32 %v2538, %v2698
  %v2700 = vpop.f32.mrb[0].mxu0
  %v2701 = vpop.f32.mrb[0].mxu0
  %v2702 = vadd.f32 %v2541, %v2701
  %v2703 = vpop.f32.mrb[0].mxu0
  %2704 = vmatprep.mubr.bf16.mxu0 0
  %2705 = vmatmul.mubr.bf16.gmra.mrb[0].mxu0 %v2213
  %v2706 = vpop.f32.mrb[0].mxu0
  %v2707 = vadd.f32 %v2546, %v2706
  %v2708 = vpop.f32.mrb[0].mxu0
  %v2709 = vpop.f32.mrb[0].mxu0
  %v2710 = vadd.f32 %v2549, %v2709
  %v2711 = vpop.f32.mrb[0].mxu0
  %2712 = vmatprep.mubr.bf16.mxu0 0
  %2713 = vmatmul.mubr.bf16.gmra.mrb[0].mxu0 %v2216
  %v2714 = vpop.f32.mrb[0].mxu0
  %v2715 = vadd.f32 %v2554, %v2714
  %v2716 = vpop.f32.mrb[0].mxu0
  %v2717 = vpop.f32.mrb[0].mxu0
  %v2718 = vadd.f32 %v2557, %v2717
  %v2719 = vpop.f32.mrb[0].mxu0
  %2720 = vmatprep.mubr.bf16.mxu0 0
  %2721 = vmatmul.mubr.bf16.gmra.mrb[0].mxu0 %v2219
  %v2722 = vpop.f32.mrb[0].mxu0
  %v2723 = vadd.f32 %v2562, %v2722
  %v2724 = vpop.f32.mrb[0].mxu0
  %v2725 = vpop.f32.mrb[0].mxu0
  %v2726 = vadd.f32 %v2565, %v2725
  %v2727 = vpop.f32.mrb[0].mxu0
  %2728 = vmatprep.mubr.bf16.mxu0 0
  %2729 = vmatmul.mubr.bf16.gmra.mrb[0].mxu0 %v2222
  %v2730 = vpop.f32.mrb[0].mxu0
  %v2731 = vadd.f32 %v2570, %v2730
  %v2732 = vpop.f32.mrb[0].mxu0
  %v2733 = vpop.f32.mrb[0].mxu0
  %v2734 = vadd.f32 %v2573, %v2733
  %v2735 = vpop.f32.mrb[0].mxu0
  %2736 = vdwg.mxu0
  %2737 = vst [vmem:[%s6] sm:$0xff] %v2611
  %2738 = vst [vmem:[%s6 + $0x8] sm:$0xff] %v2614
  %2739 = vst [vmem:[%s6 + $0x10] sm:$0xff] %v2619
  %2740 = vst [vmem:[%s6 + $0x18] sm:$0xff] %v2622
  %2741 = vst [vmem:[%s6 + $0x20] sm:$0xff] %v2627
  %2742 = vst [vmem:[%s6 + $0x28] sm:$0xff] %v2630
  %2743 = vst [vmem:[%s6 + $0x30] sm:$0xff] %v2635
  %2744 = vst [vmem:[%s6 + $0x38] sm:$0xff] %v2638
  %2745 = vst [vmem:[%s6 + $0x40] sm:$0xff] %v2643
  %2746 = vst [vmem:[%s6 + $0x48] sm:$0xff] %v2646
  %2747 = vst [vmem:[%s6 + $0x50] sm:$0xff] %v2651
  %2748 = vst [vmem:[%s6 + $0x58] sm:$0xff] %v2654
  %2749 = vst [vmem:[%s6 + $0x60] sm:$0xff] %v2659
  %2750 = vst [vmem:[%s6 + $0x68] sm:$0xff] %v2662
  %2751 = vst [vmem:[%s6 + $0x70] sm:$0xff] %v2667
  %2752 = vst [vmem:[%s6 + $0x78] sm:$0xff] %v2670
  %2753 = vst [vmem:[%s6 + $0x80] sm:$0xff] %v2675
  %2754 = vst [vmem:[%s6 + $0x88] sm:$0xff] %v2678
  %2755 = vst [vmem:[%s6 + $0x90] sm:$0xff] %v2683
  %2756 = vst [vmem:[%s6 + $0x98] sm:$0xff] %v2686
  %2757 = vst [vmem:[%s6 + $0xa0] sm:$0xff] %v2691
  %2758 = vst [vmem:[%s6 + $0xa8] sm:$0xff] %v2694
  %2759 = vst [vmem:[%s6 + $0xb0] sm:$0xff] %v2699
  %2760 = vst [vmem:[%s6 + $0xb8] sm:$0xff] %v2702
  %2761 = vst [vmem:[%s6 + $0xc0] sm:$0xff] %v2707
  %2762 = vst [vmem:[%s6 + $0xc8] sm:$0xff] %v2710
  %2763 = vst [vmem:[%s6 + $0xd0] sm:$0xff] %v2715
  %2764 = vst [vmem:[%s6 + $0xd8] sm:$0xff] %v2718
  %2765 = vst [vmem:[%s6 + $0xe0] sm:$0xff] %v2723
  %2766 = vst [vmem:[%s6 + $0xe8] sm:$0xff] %v2726
  %2767 = vst [vmem:[%s6 + $0xf0] sm:$0xff] %v2731
  %2768 = vst [vmem:[%s6 + $0xf8] sm:$0xff] %v2734
  // Predicated region
  $region26: #{forward.1} parent=0 // pred_check
    _
  $region27: #{forward.1} parent=0 // pred_check_branch
    %2770 = sbr.rel (0) target = $region29
  $region28: #{forward.1} parent=0 // pred_region
    _
  $region29: #{forward.1} parent=0 // pred_fallthru
    _
  // Predicated region
  $region30: #{forward.1} parent=0 // pred_check
    _
  $region31: #{forward.1} parent=0 // pred_check_branch
    %2772 = sbr.rel (0) target = $region33
  $region32: #{forward.1} parent=0 // pred_region
    _
  $region33: #{forward.1} parent=0 // pred_fallthru
    _

</llo_original>
